<compile_context>
chip_gen: v6e
topology: v6e:2x2x1
jax: 0.10.0
libtpu: 0.0.40
codegen_flags: <defaults>
</compile_context>

<pallas_src>
import functools

import jax
import jax.numpy as jnp
from jax.experimental import pallas as pl
from jax.experimental.pallas import tpu as pltpu

# Logical (PyTorch) dims.
LV_NUMBER = 10
IN_DIM = 784
HID_DIM = 392

# Lane-padded internal dims (multiples of 128).
HID_PAD = 512    # 4 * 128
LV_PAD = 128     # 1 * 128


def _round_up(x, m):
    return ((x + m - 1) // m) * m


def _pad2(a, rows, cols):
    return jnp.pad(a, ((0, rows - a.shape[0]), (0, cols - a.shape[1])))


def _autoencoder_kernel(x_ref,
                        w1_ref, b1_ref,
                        w2_ref, b2_ref,
                        w3_ref, b3_ref,
                        w4_ref, b4_ref,
                        recon_ref, lv_ref):
    # x tile arrives f32; cast to the MXU operand dtype in-kernel (hidden
    # under the matmuls) instead of an extra HBM read/write in the wrapper.
    x = x_ref[...].astype(w1_ref.dtype)

    # encoder: Linear(784->392) + ReLU      (N padded to 512)
    h1 = jnp.dot(x, w1_ref[...], preferred_element_type=jnp.float32) + b1_ref[...]
    h1 = jnp.maximum(h1, 0.0)

    # encoder: Linear(392->10) + ReLU       (512 -> 128) -> latent Lv
    lv = jnp.dot(h1.astype(w2_ref.dtype), w2_ref[...],
                 preferred_element_type=jnp.float32) + b2_ref[...]
    lv = jnp.maximum(lv, 0.0)
    lv_ref[...] = lv.astype(lv_ref.dtype)       # lane-dense (128) store

    # decoder: Linear(10->392) + ReLU       (128 -> 512)
    h2 = jnp.dot(lv.astype(w3_ref.dtype), w3_ref[...],
                 preferred_element_type=jnp.float32) + b3_ref[...]
    h2 = jnp.maximum(h2, 0.0)

    # decoder: Linear(392->784) + Sigmoid   (512 -> 784)
    logits = jnp.dot(h2.astype(w4_ref.dtype), w4_ref[...],
                     preferred_element_type=jnp.float32) + b4_ref[...]
    recon_ref[...] = jax.nn.sigmoid(logits).astype(recon_ref.dtype)


def prepare_params(params, *, use_bf16=True):
    """Pad hidden/latent dims to lane multiples and cast ONCE, outside the
    per-call path.  Weights in the MXU operand dtype, biases in f32."""
    wdt = jnp.bfloat16 if use_bf16 else jnp.float32
    return {
        "w1": _pad2(params["w1"], IN_DIM, HID_PAD).astype(wdt),
        "b1": _pad2(params["b1"], 1, HID_PAD).astype(jnp.float32),
        "w2": _pad2(params["w2"], HID_PAD, LV_PAD).astype(wdt),
        "b2": _pad2(params["b2"], 1, LV_PAD).astype(jnp.float32),
        "w3": _pad2(params["w3"], LV_PAD, HID_PAD).astype(wdt),
        "b3": _pad2(params["b3"], 1, HID_PAD).astype(jnp.float32),
        "w4": _pad2(params["w4"], HID_PAD, IN_DIM).astype(wdt),
        "b4": _pad2(params["b4"], 1, IN_DIM).astype(jnp.float32),
    }


def _batch_dim_semantics():
    # On v7x (2 TensorCores per chip) split the batch grid axis across cores;
    # elsewhere plain "parallel".
    try:
        kind = jax.devices()[0].device_kind.lower()
    except Exception:
        kind = ""
    if "v7" in kind:
        return (pltpu.CORE_PARALLEL,)
    return (pltpu.PARALLEL,)


def autoencoder_forward(x, prep, *, batch_tile=512, recon_dtype=None):
    """x: [B, 784] float32.  prep: output of prepare_params().

    Returns (recon [B, 784], Lv [B, 10]) matching the PyTorch AutoEncoder.
    """
    B = x.shape[0]
    w_dtype = prep["w1"].dtype
    w_itemsize = jnp.dtype(w_dtype).itemsize
    if recon_dtype is None:
        # bf16 path -> recon (largest HBM stream) emitted in bf16.
        recon_dtype = w_dtype
    recon_itemsize = jnp.dtype(recon_dtype).itemsize

    # Adaptive batch tile, no batch padding of the arrays themselves:
    #  - small B: a single block equal to the full batch (always legal);
    #  - large B: multiple-of-8 tile, boundary block's OOB rows are dropped.
    if B <= batch_tile:
        TB = B
    else:
        TB = max(8, (batch_tile // 8) * 8)
    grid = (pl.cdiv(B, TB),)

    in_specs = [
        pl.BlockSpec((TB, IN_DIM), lambda i: (i, 0)),          # x (streams)
        pl.BlockSpec((IN_DIM, HID_PAD), lambda i: (0, 0)),     # w1 (resident)
        pl.BlockSpec((1, HID_PAD), lambda i: (0, 0)),          # b1
        pl.BlockSpec((HID_PAD, LV_PAD), lambda i: (0, 0)),     # w2
        pl.BlockSpec((1, LV_PAD), lambda i: (0, 0)),           # b2
        pl.BlockSpec((LV_PAD, HID_PAD), lambda i: (0, 0)),     # w3
        pl.BlockSpec((1, HID_PAD), lambda i: (0, 0)),          # b3
        pl.BlockSpec((HID_PAD, IN_DIM), lambda i: (0, 0)),     # w4
        pl.BlockSpec((1, IN_DIM), lambda i: (0, 0)),           # b4
    ]
    out_specs = (
        pl.BlockSpec((TB, IN_DIM), lambda i: (i, 0)),          # recon (streams)
        pl.BlockSpec((TB, LV_PAD), lambda i: (i, 0)),          # Lv (lane-dense)
    )

    # VMEM budget: (possibly double-buffered) resident weights + double
    # buffered I/O tiles + activation temporaries, with headroom.  Clamped so
    # it never over-requests on v7x's 64 MiB per-TC VMEM.
    w_bytes = (IN_DIM * HID_PAD + HID_PAD * LV_PAD
               + LV_PAD * HID_PAD + HID_PAD * IN_DIM) * w_itemsize
    b_bytes = (2 * HID_PAD + LV_PAD + IN_DIM) * 4
    io_tile_bytes = TB * (IN_DIM * 4 + IN_DIM * recon_itemsize + LV_PAD * 4)
    act_bytes = TB * (2 * HID_PAD + LV_PAD + IN_DIM) * (4 + w_itemsize)
    vmem_limit_bytes = int(1.4 * (2 * (w_bytes + b_bytes)
                                  + 2 * io_tile_bytes + act_bytes)) + (4 << 20)
    vmem_limit_bytes = max(16 << 20, min(vmem_limit_bytes, 96 << 20))

    flops = 2 * B * (IN_DIM * HID_PAD + HID_PAD * LV_PAD
                     + LV_PAD * HID_PAD + HID_PAD * IN_DIM)
    bytes_accessed = (B * IN_DIM * 4 + w_bytes + b_bytes
                      + B * IN_DIM * recon_itemsize + B * LV_PAD * 4)
    cost = pl.CostEstimate(flops=flops,
                           transcendentals=2 * B * IN_DIM,  # sigmoid: exp + recip
                           bytes_accessed=bytes_accessed)

    recon, lv_p = pl.pallas_call(
        _autoencoder_kernel,
        grid=grid,
        in_specs=in_specs,
        out_specs=out_specs,
        out_shape=(
            jax.ShapeDtypeStruct((B, IN_DIM), recon_dtype),
            jax.ShapeDtypeStruct((B, LV_PAD), jnp.float32),
        ),
        compiler_params=pltpu.CompilerParams(
            dimension_semantics=_batch_dim_semantics(),
            vmem_limit_bytes=vmem_limit_bytes,
        ),
        cost_estimate=cost,
    )(x, prep["w1"], prep["b1"], prep["w2"], prep["b2"],
      prep["w3"], prep["b3"], prep["w4"], prep["b4"])

    # Only the latent carries lane padding; recon is already (B, 784).
    return recon, lv_p[:, :LV_NUMBER]


def xavier_normal(key, fan_in, fan_out):
    # nn.init.xavier_normal_: std = sqrt(2 / (fan_in + fan_out)).
    # Stored as (in, out) so the kernel computes x @ W (== PyTorch x @ W.T).
    std = (2.0 / (fan_in + fan_out)) ** 0.5
    return std * jax.random.normal(key, (fan_in, fan_out), dtype=jnp.float32)


def init_params(key):
    k1, k2, k3, k4 = jax.random.split(key, 4)
    return {
        "w1": xavier_normal(k1, IN_DIM, HID_DIM),
        "b1": jnp.zeros((1, HID_DIM), jnp.float32),
        "w2": xavier_normal(k2, HID_DIM, LV_NUMBER),
        "b2": jnp.zeros((1, LV_NUMBER), jnp.float32),
        "w3": xavier_normal(k3, LV_NUMBER, HID_DIM),
        "b3": jnp.zeros((1, HID_DIM), jnp.float32),
        "w4": xavier_normal(k4, HID_DIM, IN_DIM),
        "b4": jnp.zeros((1, IN_DIM), jnp.float32),
    }


def reference_forward(x, p):
    h1 = jnp.maximum(x @ p["w1"] + p["b1"], 0.0)
    lv = jnp.maximum(h1 @ p["w2"] + p["b2"], 0.0)
    h2 = jnp.maximum(lv @ p["w3"] + p["b3"], 0.0)
    recon = jax.nn.sigmoid(h2 @ p["w4"] + p["b4"])
    return recon, lv


if __name__ == "__main__":
    key = jax.random.PRNGKey(0)
    kx, kx2, kp = jax.random.split(key, 3)

    params = init_params(kp)
    prep_f32 = prepare_params(params, use_bf16=False)    # tight-check path
    prep_bf16 = prepare_params(params, use_bf16=True)    # fast default path

    fwd = jax.jit(autoencoder_forward,
                  static_argnames=("batch_tile", "recon_dtype"))

    # --- small batch, f32 MXU path, tight tolerance ---
    B = 8
    x = jax.random.normal(kx, (B, IN_DIM), dtype=jnp.float32)
    recon, lv = jax.block_until_ready(fwd(x, prep_f32))
    ref_recon, ref_lv = reference_forward(x, params)
    assert recon.shape == (B, IN_DIM) and lv.shape == (B, LV_NUMBER)
    assert jnp.allclose(recon, ref_recon, atol=1e-4, rtol=1e-4)
    assert jnp.allclose(lv, ref_lv, atol=1e-4, rtol=1e-4)

    # --- non-multiple batch: several pipelined grid steps + partial boundary block ---
    B2 = 300
    x2 = jax.random.normal(kx2, (B2, IN_DIM), dtype=jnp.float32)
    recon2, lv2 = jax.block_until_ready(fwd(x2, prep_f32, batch_tile=128))
    ref_recon2, ref_lv2 = reference_forward(x2, params)
    assert recon2.shape == (B2, IN_DIM) and lv2.shape == (B2, LV_NUMBER)
    assert jnp.allclose(recon2, ref_recon2, atol=1e-4, rtol=1e-4)
    assert jnp.allclose(lv2, ref_lv2, atol=1e-4, rtol=1e-4)

    # --- default bf16 MXU path (recon emitted in bf16), loose tolerance ---
    recon3, lv3 = jax.block_until_ready(fwd(x2, prep_bf16))
    assert recon3.dtype == jnp.bfloat16
    assert jnp.max(jnp.abs(recon3.astype(jnp.float32) - ref_recon2)) < 0.1
    assert jnp.max(jnp.abs(lv3 - ref_lv2)) < 0.1

    # TODO(synk): optional fp8 quantization of w1/w4 on v7x (review item) not
    # implemented; requires accuracy validation against the f32 reference.

    print("KERNEL_OK")
</pallas_src>

<mosaic_0001>
module attributes {stable_mosaic.version = 11 : i64} {
  func.func @_autoencoder_kernel(%arg0: i32, %arg1: memref<8x784xf32, #tpu.memory_space<vmem>>, %arg2: memref<784x512xf32, #tpu.memory_space<vmem>>, %arg3: memref<1x512xf32, #tpu.memory_space<vmem>>, %arg4: memref<512x128xf32, #tpu.memory_space<vmem>>, %arg5: memref<1x128xf32, #tpu.memory_space<vmem>>, %arg6: memref<128x512xf32, #tpu.memory_space<vmem>>, %arg7: memref<1x512xf32, #tpu.memory_space<vmem>>, %arg8: memref<512x784xf32, #tpu.memory_space<vmem>>, %arg9: memref<1x784xf32, #tpu.memory_space<vmem>>, %arg10: memref<8x784xf32, #tpu.memory_space<vmem>>, %arg11: memref<8x128xf32, #tpu.memory_space<vmem>>) attributes {dimension_semantics = [#tpu.dimension_semantics<parallel>], iteration_bounds = array<i64: 1>, scalar_prefetch = 0 : i64, scratch_operands = 0 : i64, tpu.core_type = #tpu.core_type<tc>, window_params = [{transform_indices = @transform_0, window_bounds = array<i64: 8, 784>}, {pipeline_mode = #tpu.pipeline_mode<synchronous>, transform_indices = @transform_1, window_bounds = array<i64: 784, 512>}, {pipeline_mode = #tpu.pipeline_mode<synchronous>, transform_indices = @transform_2, window_bounds = array<i64: 1, 512>}, {pipeline_mode = #tpu.pipeline_mode<synchronous>, transform_indices = @transform_3, window_bounds = array<i64: 512, 128>}, {pipeline_mode = #tpu.pipeline_mode<synchronous>, transform_indices = @transform_4, window_bounds = array<i64: 1, 128>}, {pipeline_mode = #tpu.pipeline_mode<synchronous>, transform_indices = @transform_5, window_bounds = array<i64: 128, 512>}, {pipeline_mode = #tpu.pipeline_mode<synchronous>, transform_indices = @transform_6, window_bounds = array<i64: 1, 512>}, {pipeline_mode = #tpu.pipeline_mode<synchronous>, transform_indices = @transform_7, window_bounds = array<i64: 512, 784>}, {pipeline_mode = #tpu.pipeline_mode<synchronous>, transform_indices = @transform_8, window_bounds = array<i64: 1, 784>}, {transform_indices = @transform_9, window_bounds = array<i64: 8, 784>}, {transform_indices = @transform_10, window_bounds = array<i64: 8, 128>}]} {
    %c0 = arith.constant 0 : index
    %c0_0 = arith.constant 0 : index
    %0 = vector.load %arg1[%c0, %c0_0] : memref<8x784xf32, #tpu.memory_space<vmem>>, vector<8x784xf32>
    %c0_1 = arith.constant 0 : index
    %c0_2 = arith.constant 0 : index
    %1 = vector.load %arg2[%c0_1, %c0_2] : memref<784x512xf32, #tpu.memory_space<vmem>>, vector<784x512xf32>
    %cst = arith.constant dense<0.000000e+00> : vector<8x512xf32>
    %2 = tpu.matmul %0, %1, %cst {dimension_numbers = #tpu.dot_dimension_numbers<[1], [0], [0], [1], [0, 0, 1, 1], [], []>} : vector<8x784xf32>, vector<784x512xf32>, vector<8x512xf32> -> vector<8x512xf32>
    %c0_3 = arith.constant 0 : index
    %c0_4 = arith.constant 0 : index
    %3 = vector.load %arg3[%c0_3, %c0_4] : memref<1x512xf32, #tpu.memory_space<vmem>>, vector<1x512xf32>
    %4 = vector.broadcast %3 : vector<1x512xf32> to vector<8x512xf32>
    %5 = arith.addf %2, %4 : vector<8x512xf32>
    %cst_5 = arith.constant 0.000000e+00 : f32
    %6 = vector.broadcast %cst_5 : f32 to vector<8x512xf32>
    %7 = arith.maximumf %5, %6 : vector<8x512xf32>
    %c0_6 = arith.constant 0 : index
    %c0_7 = arith.constant 0 : index
    %8 = vector.load %arg4[%c0_6, %c0_7] : memref<512x128xf32, #tpu.memory_space<vmem>>, vector<512x128xf32>
    %cst_8 = arith.constant dense<0.000000e+00> : vector<8x128xf32>
    %9 = tpu.matmul %7, %8, %cst_8 {dimension_numbers = #tpu.dot_dimension_numbers<[1], [0], [0], [1], [0, 0, 1, 1], [], []>} : vector<8x512xf32>, vector<512x128xf32>, vector<8x128xf32> -> vector<8x128xf32>
    %c0_9 = arith.constant 0 : index
    %c0_10 = arith.constant 0 : index
    %10 = vector.load %arg5[%c0_9, %c0_10] : memref<1x128xf32, #tpu.memory_space<vmem>>, vector<1x128xf32>
    %11 = vector.broadcast %10 : vector<1x128xf32> to vector<8x128xf32>
    %12 = arith.addf %9, %11 : vector<8x128xf32>
    %cst_11 = arith.constant 0.000000e+00 : f32
    %13 = vector.broadcast %cst_11 : f32 to vector<8x128xf32>
    %14 = arith.maximumf %12, %13 : vector<8x128xf32>
    %c0_12 = arith.constant 0 : index
    %c0_13 = arith.constant 0 : index
    %15 = vector.load %arg11[%c0_12, %c0_13] : memref<8x128xf32, #tpu.memory_space<vmem>>, vector<8x128xf32>
    tpu.vector_store %arg11[%c0_12, %c0_13], %14 {strides = array<i32>} : memref<8x128xf32, #tpu.memory_space<vmem>>, vector<8x128xf32>,
    %c0_14 = arith.constant 0 : index
    %c0_15 = arith.constant 0 : index
    %16 = vector.load %arg6[%c0_14, %c0_15] : memref<128x512xf32, #tpu.memory_space<vmem>>, vector<128x512xf32>
    %cst_16 = arith.constant dense<0.000000e+00> : vector<8x512xf32>
    %17 = tpu.matmul %14, %16, %cst_16 {dimension_numbers = #tpu.dot_dimension_numbers<[1], [0], [0], [1], [0, 0, 1, 1], [], []>} : vector<8x128xf32>, vector<128x512xf32>, vector<8x512xf32> -> vector<8x512xf32>
    %c0_17 = arith.constant 0 : index
    %c0_18 = arith.constant 0 : index
    %18 = vector.load %arg7[%c0_17, %c0_18] : memref<1x512xf32, #tpu.memory_space<vmem>>, vector<1x512xf32>
    %19 = vector.broadcast %18 : vector<1x512xf32> to vector<8x512xf32>
    %20 = arith.addf %17, %19 : vector<8x512xf32>
    %cst_19 = arith.constant 0.000000e+00 : f32
    %21 = vector.broadcast %cst_19 : f32 to vector<8x512xf32>
    %22 = arith.maximumf %20, %21 : vector<8x512xf32>
    %c0_20 = arith.constant 0 : index
    %c0_21 = arith.constant 0 : index
    %23 = vector.load %arg8[%c0_20, %c0_21] : memref<512x784xf32, #tpu.memory_space<vmem>>, vector<512x784xf32>
    %cst_22 = arith.constant dense<0.000000e+00> : vector<8x784xf32>
    %24 = tpu.matmul %22, %23, %cst_22 {dimension_numbers = #tpu.dot_dimension_numbers<[1], [0], [0], [1], [0, 0, 1, 1], [], []>} : vector<8x512xf32>, vector<512x784xf32>, vector<8x784xf32> -> vector<8x784xf32>
    %c0_23 = arith.constant 0 : index
    %c0_24 = arith.constant 0 : index
    %25 = vector.load %arg9[%c0_23, %c0_24] : memref<1x784xf32, #tpu.memory_space<vmem>>, vector<1x784xf32>
    %26 = vector.broadcast %25 : vector<1x784xf32> to vector<8x784xf32>
    %27 = arith.addf %24, %26 : vector<8x784xf32>
    %28 = arith.negf %27 : vector<8x784xf32>
    %29 = math.exp %28 : vector<8x784xf32>
    %cst_25 = arith.constant 1.000000e+00 : f32
    %30 = vector.broadcast %cst_25 : f32 to vector<8x784xf32>
    %31 = arith.addf %30, %29 : vector<8x784xf32>
    %32 = arith.divf %30, %31 : vector<8x784xf32>
    %c0_26 = arith.constant 0 : index
    %c0_27 = arith.constant 0 : index
    %33 = vector.load %arg10[%c0_26, %c0_27] : memref<8x784xf32, #tpu.memory_space<vmem>>, vector<8x784xf32>
    tpu.vector_store %arg10[%c0_26, %c0_27], %32 {strides = array<i32>} : memref<8x784xf32, #tpu.memory_space<vmem>>, vector<8x784xf32>,
    return
  }
  func.func @transform_0(%arg0: i32) -> (i32, i32) {
    %c0_i32 = arith.constant 0 : i32
    %c0_i32_0 = arith.constant 0 : i32
    return %arg0, %c0_i32 : i32, i32
  }
  func.func @transform_1(%arg0: i32) -> (i32, i32) {
    %c0_i32 = arith.constant 0 : i32
    %c0_i32_0 = arith.constant 0 : i32
    %c0_i32_1 = arith.constant 0 : i32
    return %c0_i32, %c0_i32_0 : i32, i32
  }
  func.func @transform_2(%arg0: i32) -> (i32, i32) {
    %c0_i32 = arith.constant 0 : i32
    %c0_i32_0 = arith.constant 0 : i32
    %c0_i32_1 = arith.constant 0 : i32
    return %c0_i32, %c0_i32_0 : i32, i32
  }
  func.func @transform_3(%arg0: i32) -> (i32, i32) {
    %c0_i32 = arith.constant 0 : i32
    %c0_i32_0 = arith.constant 0 : i32
    %c0_i32_1 = arith.constant 0 : i32
    return %c0_i32, %c0_i32_0 : i32, i32
  }
  func.func @transform_4(%arg0: i32) -> (i32, i32) {
    %c0_i32 = arith.constant 0 : i32
    %c0_i32_0 = arith.constant 0 : i32
    %c0_i32_1 = arith.constant 0 : i32
    return %c0_i32, %c0_i32_0 : i32, i32
  }
  func.func @transform_5(%arg0: i32) -> (i32, i32) {
    %c0_i32 = arith.constant 0 : i32
    %c0_i32_0 = arith.constant 0 : i32
    %c0_i32_1 = arith.constant 0 : i32
    return %c0_i32, %c0_i32_0 : i32, i32
  }
  func.func @transform_6(%arg0: i32) -> (i32, i32) {
    %c0_i32 = arith.constant 0 : i32
    %c0_i32_0 = arith.constant 0 : i32
    %c0_i32_1 = arith.constant 0 : i32
    return %c0_i32, %c0_i32_0 : i32, i32
  }
  func.func @transform_7(%arg0: i32) -> (i32, i32) {
    %c0_i32 = arith.constant 0 : i32
    %c0_i32_0 = arith.constant 0 : i32
    %c0_i32_1 = arith.constant 0 : i32
    return %c0_i32, %c0_i32_0 : i32, i32
  }
  func.func @transform_8(%arg0: i32) -> (i32, i32) {
    %c0_i32 = arith.constant 0 : i32
    %c0_i32_0 = arith.constant 0 : i32
    %c0_i32_1 = arith.constant 0 : i32
    return %c0_i32, %c0_i32_0 : i32, i32
  }
  func.func @transform_9(%arg0: i32) -> (i32, i32) {
    %c0_i32 = arith.constant 0 : i32
    %c0_i32_0 = arith.constant 0 : i32
    return %arg0, %c0_i32 : i32, i32
  }
  func.func @transform_10(%arg0: i32) -> (i32, i32) {
    %c0_i32 = arith.constant 0 : i32
    %c0_i32_0 = arith.constant 0 : i32
    return %arg0, %c0_i32 : i32, i32
  }
}

</mosaic_0001>

<llo_original>
// kernel: autoencoder_forward.1
$region0: #{autoencoder_forward.1}
  #allocation0 [shape = 'u32[]', space=smem, size = 0x4, offset = 0x4, fixed_abs, tag = 'smem constant byte address 0x4 - core index']
  #allocation1 [shape = 'u32[144,128]{1,0:T(1,128)}', space=vmem, size = 0x12000, scoped, tag = 'internal scratch']
  %s0 = inlined_call_operand.vmem [shape: f32[8,784], index: 0, kind: input, shape index: {}]
  %s1 = inlined_call_operand.vmem [shape: f32[784,512], index: 1, kind: input, shape index: {}]
  %s2 = inlined_call_operand.vmem [shape: f32[1,512], index: 2, kind: input, shape index: {}]
  %s3 = inlined_call_operand.vmem [shape: f32[512,128], index: 3, kind: input, shape index: {}]
  %s4 = inlined_call_operand.vmem [shape: f32[1,128], index: 4, kind: input, shape index: {}]
  %s5 = inlined_call_operand.vmem [shape: f32[128,512], index: 5, kind: input, shape index: {}]
  %s6 = inlined_call_operand.vmem [shape: f32[1,512], index: 6, kind: input, shape index: {}]
  %s7 = inlined_call_operand.vmem [shape: f32[512,784], index: 7, kind: input, shape index: {}]
  %s8 = inlined_call_operand.vmem [shape: f32[1,784], index: 8, kind: input, shape index: {}]
  %s9 = inlined_call_operand.hbm [shape: f32[8,784], index: 9, kind: output, shape index: {0}]
  %s10 = inlined_call_operand.hbm [shape: f32[8,128], index: 10, kind: output, shape index: {1}]
  %11 = xla_tuple %s9, %s10
  %s12 = sld [smem:[#allocation0]]
  $region54: #{autoencoder_forward.1} parent=0
    _
  %s14 = ssub.s32 1, %s12
  %s15 = scalar_select 0, %s14, %s12
  $region1: #{autoencoder_forward.1} parent=0
    #allocation2 [shape = 'u8[28672]{0}', space=vmem, size = 0x7000, scoped, tag = 'output window, operand 0, single buffered']
    #allocation3 [shape = 's32[1]{0}', space=sflag, size = 0x4, scoped, tag = 'scoped memory for autoencoder_forward.1']
    #allocation4 [shape = 'u8[4096]{0}', space=vmem, size = 0x1000, scoped, tag = 'output window, operand 1, single buffered']
    #allocation5 [shape = 's32[1]{0}', space=sflag, size = 0x4, scoped, tag = 'scoped memory for autoencoder_forward.1']
    %16 = vsyncpa [#allocation3], 0
    %17 = vsyncpa [#allocation5], 0
    // Predicated region
    $region2: #{autoencoder_forward.1} parent=1 // pred_check
      _
    $region3: #{autoencoder_forward.1} parent=1 // pred_check_branch
      %19 = sbr.rel (0) target = $region5
    $region4: #{autoencoder_forward.1} parent=1 // pred_region
      _
    $region5: #{autoencoder_forward.1} parent=1 // pred_fallthru
      _
    // Predicated region
    $region6: #{autoencoder_forward.1} parent=1 // pred_check
      _
    $region7: #{autoencoder_forward.1} parent=1 // pred_check_branch
      %21 = sbr.rel (0) target = $region9
    $region8: #{autoencoder_forward.1} parent=1 // pred_region
      _
    $region9: #{autoencoder_forward.1} parent=1 // pred_fallthru
      _
    // Predicated region
    $region10: #{autoencoder_forward.1} parent=1 // pred_check
      _
    $region11: #{autoencoder_forward.1} parent=1 // pred_check_branch
      %23 = sbr.rel (0) target = $region13
    $region12: #{autoencoder_forward.1} parent=1 // pred_region
      _
    $region13: #{autoencoder_forward.1} parent=1 // pred_fallthru
      _
    // Predicated region
    $region14: #{autoencoder_forward.1} parent=1 // pred_check
      _
    $region15: #{autoencoder_forward.1} parent=1 // pred_check_branch
      %25 = sbr.rel (0) target = $region17
    $region16: #{autoencoder_forward.1} parent=1 // pred_region
      _
    $region17: #{autoencoder_forward.1} parent=1 // pred_fallthru
      _
    // Predicated region
    $region18: #{autoencoder_forward.1} parent=1 // pred_check
      _
    $region19: #{autoencoder_forward.1} parent=1 // pred_check_branch
      %27 = sbr.rel (0) target = $region21
    $region20: #{autoencoder_forward.1} parent=1 // pred_region
      _
    $region21: #{autoencoder_forward.1} parent=1 // pred_fallthru
      _
    // Predicated region
    $region22: #{autoencoder_forward.1} parent=1 // pred_check
      _
    $region23: #{autoencoder_forward.1} parent=1 // pred_check_branch
      %29 = sbr.rel (0) target = $region25
    $region24: #{autoencoder_forward.1} parent=1 // pred_region
      _
    $region25: #{autoencoder_forward.1} parent=1 // pred_fallthru
      _
    // Predicated region
    $region26: #{autoencoder_forward.1} parent=1 // pred_check
      _
    $region27: #{autoencoder_forward.1} parent=1 // pred_check_branch
      %31 = sbr.rel (0) target = $region29
    $region28: #{autoencoder_forward.1} parent=1 // pred_region
      _
    $region29: #{autoencoder_forward.1} parent=1 // pred_fallthru
      _
    // Predicated region
    $region30: #{autoencoder_forward.1} parent=1 // pred_check
      _
    $region31: #{autoencoder_forward.1} parent=1 // pred_check_branch
      %33 = sbr.rel (0) target = $region33
    $region32: #{autoencoder_forward.1} parent=1 // pred_region
      _
    $region33: #{autoencoder_forward.1} parent=1 // pred_fallthru
      _
    // Predicated region
    $region34: #{autoencoder_forward.1} parent=1 // pred_check
      _
    $region35: #{autoencoder_forward.1} parent=1 // pred_check_branch
      %35 = sbr.rel (0) target = $region37
    $region36: #{autoencoder_forward.1} parent=1 // pred_region
      _
    $region37: #{autoencoder_forward.1} parent=1 // pred_fallthru
      _
    %v36 = vld [vmem:[%s0] sm:$0xff]
    %v37 = vld [vmem:[%s0 + $0x8] sm:$0xff]
    %v38 = vld [vmem:[%s0 + $0x10] sm:$0xff]
    %v39 = vld [vmem:[%s0 + $0x18] sm:$0xff]
    %v40 = vld [vmem:[%s0 + $0x20] sm:$0xff]
    %v41 = vld [vmem:[%s0 + $0x28] sm:$0xff]
    %v42 = vld [vmem:[%s0 + $0x30] sm:$0xff]
    %v43 = vld [vmem:[%s1] sm:$0xff]
    %v44 = vld [vmem:[%s1 + $0x8] sm:$0xff]
    %v45 = vld [vmem:[%s1 + $0x10] sm:$0xff]
    %v46 = vld [vmem:[%s1 + $0x18] sm:$0xff]
    %v47 = vld [vmem:[%s1 + $0x20] sm:$0xff]
    %v48 = vld [vmem:[%s1 + $0x28] sm:$0xff]
    %v49 = vld [vmem:[%s1 + $0x30] sm:$0xff]
    %v50 = vld [vmem:[%s1 + $0x38] sm:$0xff]
    %v51 = vld [vmem:[%s1 + $0x40] sm:$0xff]
    %v52 = vld [vmem:[%s1 + $0x48] sm:$0xff]
    %v53 = vld [vmem:[%s1 + $0x50] sm:$0xff]
    %v54 = vld [vmem:[%s1 + $0x58] sm:$0xff]
    %v55 = vld [vmem:[%s1 + $0x60] sm:$0xff]
    %v56 = vld [vmem:[%s1 + $0x68] sm:$0xff]
    %v57 = vld [vmem:[%s1 + $0x70] sm:$0xff]
    %v58 = vld [vmem:[%s1 + $0x78] sm:$0xff]
    %v59 = vld [vmem:[%s1 + $0x80] sm:$0xff]
    %v60 = vld [vmem:[%s1 + $0x88] sm:$0xff]
    %v61 = vld [vmem:[%s1 + $0x90] sm:$0xff]
    %v62 = vld [vmem:[%s1 + $0x98] sm:$0xff]
    %v63 = vld [vmem:[%s1 + $0xa0] sm:$0xff]
    %v64 = vld [vmem:[%s1 + $0xa8] sm:$0xff]
    %v65 = vld [vmem:[%s1 + $0xb0] sm:$0xff]
    %v66 = vld [vmem:[%s1 + $0xb8] sm:$0xff]
    %v67 = vld [vmem:[%s1 + $0xc0] sm:$0xff]
    %v68 = vld [vmem:[%s1 + $0xc8] sm:$0xff]
    %v69 = vld [vmem:[%s1 + $0xd0] sm:$0xff]
    %v70 = vld [vmem:[%s1 + $0xd8] sm:$0xff]
    %v71 = vld [vmem:[%s1 + $0xe0] sm:$0xff]
    %v72 = vld [vmem:[%s1 + $0xe8] sm:$0xff]
    %v73 = vld [vmem:[%s1 + $0xf0] sm:$0xff]
    %v74 = vld [vmem:[%s1 + $0xf8] sm:$0xff]
    %v75 = vld [vmem:[%s1 + $0x100] sm:$0xff]
    %v76 = vld [vmem:[%s1 + $0x108] sm:$0xff]
    %v77 = vld [vmem:[%s1 + $0x110] sm:$0xff]
    %v78 = vld [vmem:[%s1 + $0x118] sm:$0xff]
    %v79 = vld [vmem:[%s1 + $0x120] sm:$0xff]
    %v80 = vld [vmem:[%s1 + $0x128] sm:$0xff]
    %v81 = vld [vmem:[%s1 + $0x130] sm:$0xff]
    %v82 = vld [vmem:[%s1 + $0x138] sm:$0xff]
    %v83 = vld [vmem:[%s1 + $0x140] sm:$0xff]
    %v84 = vld [vmem:[%s1 + $0x148] sm:$0xff]
    %v85 = vld [vmem:[%s1 + $0x150] sm:$0xff]
    %v86 = vld [vmem:[%s1 + $0x158] sm:$0xff]
    %v87 = vld [vmem:[%s1 + $0x160] sm:$0xff]
    %v88 = vld [vmem:[%s1 + $0x168] sm:$0xff]
    %v89 = vld [vmem:[%s1 + $0x170] sm:$0xff]
    %v90 = vld [vmem:[%s1 + $0x178] sm:$0xff]
    %v91 = vld [vmem:[%s1 + $0x180] sm:$0xff]
    %v92 = vld [vmem:[%s1 + $0x188] sm:$0xff]
    %v93 = vld [vmem:[%s1 + $0x190] sm:$0xff]
    %v94 = vld [vmem:[%s1 + $0x198] sm:$0xff]
    %v95 = vld [vmem:[%s1 + $0x1a0] sm:$0xff]
    %v96 = vld [vmem:[%s1 + $0x1a8] sm:$0xff]
    %v97 = vld [vmem:[%s1 + $0x1b0] sm:$0xff]
    %v98 = vld [vmem:[%s1 + $0x1b8] sm:$0xff]
    %v99 = vld [vmem:[%s1 + $0x1c0] sm:$0xff]
    %v100 = vld [vmem:[%s1 + $0x1c8] sm:$0xff]
    %v101 = vld [vmem:[%s1 + $0x1d0] sm:$0xff]
    %v102 = vld [vmem:[%s1 + $0x1d8] sm:$0xff]
    %v103 = vld [vmem:[%s1 + $0x1e0] sm:$0xff]
    %v104 = vld [vmem:[%s1 + $0x1e8] sm:$0xff]
    %v105 = vld [vmem:[%s1 + $0x1f0] sm:$0xff]
    %v106 = vld [vmem:[%s1 + $0x1f8] sm:$0xff]
    %v107 = vld [vmem:[%s1 + $0x200] sm:$0xff]
    %v108 = vld [vmem:[%s1 + $0x208] sm:$0xff]
    %v109 = vld [vmem:[%s1 + $0x210] sm:$0xff]
    %v110 = vld [vmem:[%s1 + $0x218] sm:$0xff]
    %v111 = vld [vmem:[%s1 + $0x220] sm:$0xff]
    %v112 = vld [vmem:[%s1 + $0x228] sm:$0xff]
    %v113 = vld [vmem:[%s1 + $0x230] sm:$0xff]
    %v114 = vld [vmem:[%s1 + $0x238] sm:$0xff]
    %v115 = vld [vmem:[%s1 + $0x240] sm:$0xff]
    %v116 = vld [vmem:[%s1 + $0x248] sm:$0xff]
    %v117 = vld [vmem:[%s1 + $0x250] sm:$0xff]
    %v118 = vld [vmem:[%s1 + $0x258] sm:$0xff]
    %v119 = vld [vmem:[%s1 + $0x260] sm:$0xff]
    %v120 = vld [vmem:[%s1 + $0x268] sm:$0xff]
    %v121 = vld [vmem:[%s1 + $0x270] sm:$0xff]
    %v122 = vld [vmem:[%s1 + $0x278] sm:$0xff]
    %v123 = vld [vmem:[%s1 + $0x280] sm:$0xff]
    %v124 = vld [vmem:[%s1 + $0x288] sm:$0xff]
    %v125 = vld [vmem:[%s1 + $0x290] sm:$0xff]
    %v126 = vld [vmem:[%s1 + $0x298] sm:$0xff]
    %v127 = vld [vmem:[%s1 + $0x2a0] sm:$0xff]
    %v128 = vld [vmem:[%s1 + $0x2a8] sm:$0xff]
    %v129 = vld [vmem:[%s1 + $0x2b0] sm:$0xff]
    %v130 = vld [vmem:[%s1 + $0x2b8] sm:$0xff]
    %v131 = vld [vmem:[%s1 + $0x2c0] sm:$0xff]
    %v132 = vld [vmem:[%s1 + $0x2c8] sm:$0xff]
    %v133 = vld [vmem:[%s1 + $0x2d0] sm:$0xff]
    %v134 = vld [vmem:[%s1 + $0x2d8] sm:$0xff]
    %v135 = vld [vmem:[%s1 + $0x2e0] sm:$0xff]
    %v136 = vld [vmem:[%s1 + $0x2e8] sm:$0xff]
    %v137 = vld [vmem:[%s1 + $0x2f0] sm:$0xff]
    %v138 = vld [vmem:[%s1 + $0x2f8] sm:$0xff]
    %v139 = vld [vmem:[%s1 + $0x300] sm:$0xff]
    %v140 = vld [vmem:[%s1 + $0x308] sm:$0xff]
    %v141 = vld [vmem:[%s1 + $0x310] sm:$0xff]
    %v142 = vld [vmem:[%s1 + $0x318] sm:$0xff]
    %v143 = vld [vmem:[%s1 + $0x320] sm:$0xff]
    %v144 = vld [vmem:[%s1 + $0x328] sm:$0xff]
    %v145 = vld [vmem:[%s1 + $0x330] sm:$0xff]
    %v146 = vld [vmem:[%s1 + $0x338] sm:$0xff]
    %v147 = vld [vmem:[%s1 + $0x340] sm:$0xff]
    %v148 = vld [vmem:[%s1 + $0x348] sm:$0xff]
    %v149 = vld [vmem:[%s1 + $0x350] sm:$0xff]
    %v150 = vld [vmem:[%s1 + $0x358] sm:$0xff]
    %v151 = vld [vmem:[%s1 + $0x360] sm:$0xff]
    %v152 = vld [vmem:[%s1 + $0x368] sm:$0xff]
    %v153 = vld [vmem:[%s1 + $0x370] sm:$0xff]
    %v154 = vld [vmem:[%s1 + $0x378] sm:$0xff]
    %v155 = vld [vmem:[%s1 + $0x380] sm:$0xff]
    %v156 = vld [vmem:[%s1 + $0x388] sm:$0xff]
    %v157 = vld [vmem:[%s1 + $0x390] sm:$0xff]
    %v158 = vld [vmem:[%s1 + $0x398] sm:$0xff]
    %v159 = vld [vmem:[%s1 + $0x3a0] sm:$0xff]
    %v160 = vld [vmem:[%s1 + $0x3a8] sm:$0xff]
    %v161 = vld [vmem:[%s1 + $0x3b0] sm:$0xff]
    %v162 = vld [vmem:[%s1 + $0x3b8] sm:$0xff]
    %v163 = vld [vmem:[%s1 + $0x3c0] sm:$0xff]
    %v164 = vld [vmem:[%s1 + $0x3c8] sm:$0xff]
    %v165 = vld [vmem:[%s1 + $0x3d0] sm:$0xff]
    %v166 = vld [vmem:[%s1 + $0x3d8] sm:$0xff]
    %v167 = vld [vmem:[%s1 + $0x3e0] sm:$0xff]
    %v168 = vld [vmem:[%s1 + $0x3e8] sm:$0xff]
    %v169 = vld [vmem:[%s1 + $0x3f0] sm:$0xff]
    %v170 = vld [vmem:[%s1 + $0x3f8] sm:$0xff]
    %v171 = vld [vmem:[%s1 + $0x400] sm:$0xff]
    %v172 = vld [vmem:[%s1 + $0x408] sm:$0xff]
    %v173 = vld [vmem:[%s1 + $0x410] sm:$0xff]
    %v174 = vld [vmem:[%s1 + $0x418] sm:$0xff]
    %v175 = vld [vmem:[%s1 + $0x420] sm:$0xff]
    %v176 = vld [vmem:[%s1 + $0x428] sm:$0xff]
    %v177 = vld [vmem:[%s1 + $0x430] sm:$0xff]
    %v178 = vld [vmem:[%s1 + $0x438] sm:$0xff]
    %v179 = vld [vmem:[%s1 + $0x440] sm:$0xff]
    %v180 = vld [vmem:[%s1 + $0x448] sm:$0xff]
    %v181 = vld [vmem:[%s1 + $0x450] sm:$0xff]
    %v182 = vld [vmem:[%s1 + $0x458] sm:$0xff]
    %v183 = vld [vmem:[%s1 + $0x460] sm:$0xff]
    %v184 = vld [vmem:[%s1 + $0x468] sm:$0xff]
    %v185 = vld [vmem:[%s1 + $0x470] sm:$0xff]
    %v186 = vld [vmem:[%s1 + $0x478] sm:$0xff]
    %v187 = vld [vmem:[%s1 + $0x480] sm:$0xff]
    %v188 = vld [vmem:[%s1 + $0x488] sm:$0xff]
    %v189 = vld [vmem:[%s1 + $0x490] sm:$0xff]
    %v190 = vld [vmem:[%s1 + $0x498] sm:$0xff]
    %v191 = vld [vmem:[%s1 + $0x4a0] sm:$0xff]
    %v192 = vld [vmem:[%s1 + $0x4a8] sm:$0xff]
    %v193 = vld [vmem:[%s1 + $0x4b0] sm:$0xff]
    %v194 = vld [vmem:[%s1 + $0x4b8] sm:$0xff]
    %v195 = vld [vmem:[%s1 + $0x4c0] sm:$0xff]
    %v196 = vld [vmem:[%s1 + $0x4c8] sm:$0xff]
    %v197 = vld [vmem:[%s1 + $0x4d0] sm:$0xff]
    %v198 = vld [vmem:[%s1 + $0x4d8] sm:$0xff]
    %v199 = vld [vmem:[%s1 + $0x4e0] sm:$0xff]
    %v200 = vld [vmem:[%s1 + $0x4e8] sm:$0xff]
    %v201 = vld [vmem:[%s1 + $0x4f0] sm:$0xff]
    %v202 = vld [vmem:[%s1 + $0x4f8] sm:$0xff]
    %v203 = vld [vmem:[%s1 + $0x500] sm:$0xff]
    %v204 = vld [vmem:[%s1 + $0x508] sm:$0xff]
    %v205 = vld [vmem:[%s1 + $0x510] sm:$0xff]
    %v206 = vld [vmem:[%s1 + $0x518] sm:$0xff]
    %v207 = vld [vmem:[%s1 + $0x520] sm:$0xff]
    %v208 = vld [vmem:[%s1 + $0x528] sm:$0xff]
    %v209 = vld [vmem:[%s1 + $0x530] sm:$0xff]
    %v210 = vld [vmem:[%s1 + $0x538] sm:$0xff]
    %v211 = vld [vmem:[%s1 + $0x540] sm:$0xff]
    %v212 = vld [vmem:[%s1 + $0x548] sm:$0xff]
    %v213 = vld [vmem:[%s1 + $0x550] sm:$0xff]
    %v214 = vld [vmem:[%s1 + $0x558] sm:$0xff]
    %v215 = vld [vmem:[%s1 + $0x560] sm:$0xff]
    %v216 = vld [vmem:[%s1 + $0x568] sm:$0xff]
    %v217 = vld [vmem:[%s1 + $0x570] sm:$0xff]
    %v218 = vld [vmem:[%s1 + $0x578] sm:$0xff]
    %v219 = vld [vmem:[%s1 + $0x580] sm:$0xff]
    %v220 = vld [vmem:[%s1 + $0x588] sm:$0xff]
    %v221 = vld [vmem:[%s1 + $0x590] sm:$0xff]
    %v222 = vld [vmem:[%s1 + $0x598] sm:$0xff]
    %v223 = vld [vmem:[%s1 + $0x5a0] sm:$0xff]
    %v224 = vld [vmem:[%s1 + $0x5a8] sm:$0xff]
    %v225 = vld [vmem:[%s1 + $0x5b0] sm:$0xff]
    %v226 = vld [vmem:[%s1 + $0x5b8] sm:$0xff]
    %v227 = vld [vmem:[%s1 + $0x5c0] sm:$0xff]
    %v228 = vld [vmem:[%s1 + $0x5c8] sm:$0xff]
    %v229 = vld [vmem:[%s1 + $0x5d0] sm:$0xff]
    %v230 = vld [vmem:[%s1 + $0x5d8] sm:$0xff]
    %v231 = vld [vmem:[%s1 + $0x5e0] sm:$0xff]
    %v232 = vld [vmem:[%s1 + $0x5e8] sm:$0xff]
    %v233 = vld [vmem:[%s1 + $0x5f0] sm:$0xff]
    %v234 = vld [vmem:[%s1 + $0x5f8] sm:$0xff]
    %v235 = vld [vmem:[%s1 + $0x600] sm:$0xff]
    %v236 = vld [vmem:[%s1 + $0x608] sm:$0xff]
    %v237 = vld [vmem:[%s1 + $0x610] sm:$0xff]
    %v238 = vld [vmem:[%s1 + $0x618] sm:$0xff]
    %v239 = vld [vmem:[%s1 + $0x620] sm:$0xff]
    %v240 = vld [vmem:[%s1 + $0x628] sm:$0xff]
    %v241 = vld [vmem:[%s1 + $0x630] sm:$0xff]
    %v242 = vld [vmem:[%s1 + $0x638] sm:$0xff]
    %v243 = vld [vmem:[%s1 + $0x640] sm:$0xff]
    %v244 = vld [vmem:[%s1 + $0x648] sm:$0xff]
    %v245 = vld [vmem:[%s1 + $0x650] sm:$0xff]
    %v246 = vld [vmem:[%s1 + $0x658] sm:$0xff]
    %v247 = vld [vmem:[%s1 + $0x660] sm:$0xff]
    %v248 = vld [vmem:[%s1 + $0x668] sm:$0xff]
    %v249 = vld [vmem:[%s1 + $0x670] sm:$0xff]
    %v250 = vld [vmem:[%s1 + $0x678] sm:$0xff]
    %v251 = vld [vmem:[%s1 + $0x680] sm:$0xff]
    %v252 = vld [vmem:[%s1 + $0x688] sm:$0xff]
    %v253 = vld [vmem:[%s1 + $0x690] sm:$0xff]
    %v254 = vld [vmem:[%s1 + $0x698] sm:$0xff]
    %v255 = vld [vmem:[%s1 + $0x6a0] sm:$0xff]
    %v256 = vld [vmem:[%s1 + $0x6a8] sm:$0xff]
    %v257 = vld [vmem:[%s1 + $0x6b0] sm:$0xff]
    %v258 = vld [vmem:[%s1 + $0x6b8] sm:$0xff]
    %v259 = vld [vmem:[%s1 + $0x6c0] sm:$0xff]
    %v260 = vld [vmem:[%s1 + $0x6c8] sm:$0xff]
    %v261 = vld [vmem:[%s1 + $0x6d0] sm:$0xff]
    %v262 = vld [vmem:[%s1 + $0x6d8] sm:$0xff]
    %v263 = vld [vmem:[%s1 + $0x6e0] sm:$0xff]
    %v264 = vld [vmem:[%s1 + $0x6e8] sm:$0xff]
    %v265 = vld [vmem:[%s1 + $0x6f0] sm:$0xff]
    %v266 = vld [vmem:[%s1 + $0x6f8] sm:$0xff]
    %v267 = vld [vmem:[%s1 + $0x700] sm:$0xff]
    %v268 = vld [vmem:[%s1 + $0x708] sm:$0xff]
    %v269 = vld [vmem:[%s1 + $0x710] sm:$0xff]
    %v270 = vld [vmem:[%s1 + $0x718] sm:$0xff]
    %v271 = vld [vmem:[%s1 + $0x720] sm:$0xff]
    %v272 = vld [vmem:[%s1 + $0x728] sm:$0xff]
    %v273 = vld [vmem:[%s1 + $0x730] sm:$0xff]
    %v274 = vld [vmem:[%s1 + $0x738] sm:$0xff]
    %v275 = vld [vmem:[%s1 + $0x740] sm:$0xff]
    %v276 = vld [vmem:[%s1 + $0x748] sm:$0xff]
    %v277 = vld [vmem:[%s1 + $0x750] sm:$0xff]
    %v278 = vld [vmem:[%s1 + $0x758] sm:$0xff]
    %v279 = vld [vmem:[%s1 + $0x760] sm:$0xff]
    %v280 = vld [vmem:[%s1 + $0x768] sm:$0xff]
    %v281 = vld [vmem:[%s1 + $0x770] sm:$0xff]
    %v282 = vld [vmem:[%s1 + $0x778] sm:$0xff]
    %v283 = vld [vmem:[%s1 + $0x780] sm:$0xff]
    %v284 = vld [vmem:[%s1 + $0x788] sm:$0xff]
    %v285 = vld [vmem:[%s1 + $0x790] sm:$0xff]
    %v286 = vld [vmem:[%s1 + $0x798] sm:$0xff]
    %v287 = vld [vmem:[%s1 + $0x7a0] sm:$0xff]
    %v288 = vld [vmem:[%s1 + $0x7a8] sm:$0xff]
    %v289 = vld [vmem:[%s1 + $0x7b0] sm:$0xff]
    %v290 = vld [vmem:[%s1 + $0x7b8] sm:$0xff]
    %v291 = vld [vmem:[%s1 + $0x7c0] sm:$0xff]
    %v292 = vld [vmem:[%s1 + $0x7c8] sm:$0xff]
    %v293 = vld [vmem:[%s1 + $0x7d0] sm:$0xff]
    %v294 = vld [vmem:[%s1 + $0x7d8] sm:$0xff]
    %v295 = vld [vmem:[%s1 + $0x7e0] sm:$0xff]
    %v296 = vld [vmem:[%s1 + $0x7e8] sm:$0xff]
    %v297 = vld [vmem:[%s1 + $0x7f0] sm:$0xff]
    %v298 = vld [vmem:[%s1 + $0x7f8] sm:$0xff]
    %v299 = vld [vmem:[%s1 + $0x800] sm:$0xff]
    %v300 = vld [vmem:[%s1 + $0x808] sm:$0xff]
    %v301 = vld [vmem:[%s1 + $0x810] sm:$0xff]
    %v302 = vld [vmem:[%s1 + $0x818] sm:$0xff]
    %v303 = vld [vmem:[%s1 + $0x820] sm:$0xff]
    %v304 = vld [vmem:[%s1 + $0x828] sm:$0xff]
    %v305 = vld [vmem:[%s1 + $0x830] sm:$0xff]
    %v306 = vld [vmem:[%s1 + $0x838] sm:$0xff]
    %v307 = vld [vmem:[%s1 + $0x840] sm:$0xff]
    %v308 = vld [vmem:[%s1 + $0x848] sm:$0xff]
    %v309 = vld [vmem:[%s1 + $0x850] sm:$0xff]
    %v310 = vld [vmem:[%s1 + $0x858] sm:$0xff]
    %v311 = vld [vmem:[%s1 + $0x860] sm:$0xff]
    %v312 = vld [vmem:[%s1 + $0x868] sm:$0xff]
    %v313 = vld [vmem:[%s1 + $0x870] sm:$0xff]
    %v314 = vld [vmem:[%s1 + $0x878] sm:$0xff]
    %v315 = vld [vmem:[%s1 + $0x880] sm:$0xff]
    %v316 = vld [vmem:[%s1 + $0x888] sm:$0xff]
    %v317 = vld [vmem:[%s1 + $0x890] sm:$0xff]
    %v318 = vld [vmem:[%s1 + $0x898] sm:$0xff]
    %v319 = vld [vmem:[%s1 + $0x8a0] sm:$0xff]
    %v320 = vld [vmem:[%s1 + $0x8a8] sm:$0xff]
    %v321 = vld [vmem:[%s1 + $0x8b0] sm:$0xff]
    %v322 = vld [vmem:[%s1 + $0x8b8] sm:$0xff]
    %v323 = vld [vmem:[%s1 + $0x8c0] sm:$0xff]
    %v324 = vld [vmem:[%s1 + $0x8c8] sm:$0xff]
    %v325 = vld [vmem:[%s1 + $0x8d0] sm:$0xff]
    %v326 = vld [vmem:[%s1 + $0x8d8] sm:$0xff]
    %v327 = vld [vmem:[%s1 + $0x8e0] sm:$0xff]
    %v328 = vld [vmem:[%s1 + $0x8e8] sm:$0xff]
    %v329 = vld [vmem:[%s1 + $0x8f0] sm:$0xff]
    %v330 = vld [vmem:[%s1 + $0x8f8] sm:$0xff]
    %v331 = vld [vmem:[%s1 + $0x900] sm:$0xff]
    %v332 = vld [vmem:[%s1 + $0x908] sm:$0xff]
    %v333 = vld [vmem:[%s1 + $0x910] sm:$0xff]
    %v334 = vld [vmem:[%s1 + $0x918] sm:$0xff]
    %v335 = vld [vmem:[%s1 + $0x920] sm:$0xff]
    %v336 = vld [vmem:[%s1 + $0x928] sm:$0xff]
    %v337 = vld [vmem:[%s1 + $0x930] sm:$0xff]
    %v338 = vld [vmem:[%s1 + $0x938] sm:$0xff]
    %v339 = vld [vmem:[%s1 + $0x940] sm:$0xff]
    %v340 = vld [vmem:[%s1 + $0x948] sm:$0xff]
    %v341 = vld [vmem:[%s1 + $0x950] sm:$0xff]
    %v342 = vld [vmem:[%s1 + $0x958] sm:$0xff]
    %v343 = vld [vmem:[%s1 + $0x960] sm:$0xff]
    %v344 = vld [vmem:[%s1 + $0x968] sm:$0xff]
    %v345 = vld [vmem:[%s1 + $0x970] sm:$0xff]
    %v346 = vld [vmem:[%s1 + $0x978] sm:$0xff]
    %v347 = vld [vmem:[%s1 + $0x980] sm:$0xff]
    %v348 = vld [vmem:[%s1 + $0x988] sm:$0xff]
    %v349 = vld [vmem:[%s1 + $0x990] sm:$0xff]
    %v350 = vld [vmem:[%s1 + $0x998] sm:$0xff]
    %v351 = vld [vmem:[%s1 + $0x9a0] sm:$0xff]
    %v352 = vld [vmem:[%s1 + $0x9a8] sm:$0xff]
    %v353 = vld [vmem:[%s1 + $0x9b0] sm:$0xff]
    %v354 = vld [vmem:[%s1 + $0x9b8] sm:$0xff]
    %v355 = vld [vmem:[%s1 + $0x9c0] sm:$0xff]
    %v356 = vld [vmem:[%s1 + $0x9c8] sm:$0xff]
    %v357 = vld [vmem:[%s1 + $0x9d0] sm:$0xff]
    %v358 = vld [vmem:[%s1 + $0x9d8] sm:$0xff]
    %v359 = vld [vmem:[%s1 + $0x9e0] sm:$0xff]
    %v360 = vld [vmem:[%s1 + $0x9e8] sm:$0xff]
    %v361 = vld [vmem:[%s1 + $0x9f0] sm:$0xff]
    %v362 = vld [vmem:[%s1 + $0x9f8] sm:$0xff]
    %v363 = vld [vmem:[%s1 + $0xa00] sm:$0xff]
    %v364 = vld [vmem:[%s1 + $0xa08] sm:$0xff]
    %v365 = vld [vmem:[%s1 + $0xa10] sm:$0xff]
    %v366 = vld [vmem:[%s1 + $0xa18] sm:$0xff]
    %v367 = vld [vmem:[%s1 + $0xa20] sm:$0xff]
    %v368 = vld [vmem:[%s1 + $0xa28] sm:$0xff]
    %v369 = vld [vmem:[%s1 + $0xa30] sm:$0xff]
    %v370 = vld [vmem:[%s1 + $0xa38] sm:$0xff]
    %v371 = vld [vmem:[%s1 + $0xa40] sm:$0xff]
    %v372 = vld [vmem:[%s1 + $0xa48] sm:$0xff]
    %v373 = vld [vmem:[%s1 + $0xa50] sm:$0xff]
    %v374 = vld [vmem:[%s1 + $0xa58] sm:$0xff]
    %v375 = vld [vmem:[%s1 + $0xa60] sm:$0xff]
    %v376 = vld [vmem:[%s1 + $0xa68] sm:$0xff]
    %v377 = vld [vmem:[%s1 + $0xa70] sm:$0xff]
    %v378 = vld [vmem:[%s1 + $0xa78] sm:$0xff]
    %v379 = vld [vmem:[%s1 + $0xa80] sm:$0xff]
    %v380 = vld [vmem:[%s1 + $0xa88] sm:$0xff]
    %v381 = vld [vmem:[%s1 + $0xa90] sm:$0xff]
    %v382 = vld [vmem:[%s1 + $0xa98] sm:$0xff]
    %v383 = vld [vmem:[%s1 + $0xaa0] sm:$0xff]
    %v384 = vld [vmem:[%s1 + $0xaa8] sm:$0xff]
    %v385 = vld [vmem:[%s1 + $0xab0] sm:$0xff]
    %v386 = vld [vmem:[%s1 + $0xab8] sm:$0xff]
    %v387 = vld [vmem:[%s1 + $0xac0] sm:$0xff]
    %v388 = vld [vmem:[%s1 + $0xac8] sm:$0xff]
    %v389 = vld [vmem:[%s1 + $0xad0] sm:$0xff]
    %v390 = vld [vmem:[%s1 + $0xad8] sm:$0xff]
    %v391 = vld [vmem:[%s1 + $0xae0] sm:$0xff]
    %v392 = vld [vmem:[%s1 + $0xae8] sm:$0xff]
    %v393 = vld [vmem:[%s1 + $0xaf0] sm:$0xff]
    %v394 = vld [vmem:[%s1 + $0xaf8] sm:$0xff]
    %v395 = vld [vmem:[%s1 + $0xb00] sm:$0xff]
    %v396 = vld [vmem:[%s1 + $0xb08] sm:$0xff]
    %v397 = vld [vmem:[%s1 + $0xb10] sm:$0xff]
    %v398 = vld [vmem:[%s1 + $0xb18] sm:$0xff]
    %v399 = vld [vmem:[%s1 + $0xb20] sm:$0xff]
    %v400 = vld [vmem:[%s1 + $0xb28] sm:$0xff]
    %v401 = vld [vmem:[%s1 + $0xb30] sm:$0xff]
    %v402 = vld [vmem:[%s1 + $0xb38] sm:$0xff]
    %v403 = vld [vmem:[%s1 + $0xb40] sm:$0xff]
    %v404 = vld [vmem:[%s1 + $0xb48] sm:$0xff]
    %v405 = vld [vmem:[%s1 + $0xb50] sm:$0xff]
    %v406 = vld [vmem:[%s1 + $0xb58] sm:$0xff]
    %v407 = vld [vmem:[%s1 + $0xb60] sm:$0xff]
    %v408 = vld [vmem:[%s1 + $0xb68] sm:$0xff]
    %v409 = vld [vmem:[%s1 + $0xb70] sm:$0xff]
    %v410 = vld [vmem:[%s1 + $0xb78] sm:$0xff]
    %v411 = vld [vmem:[%s1 + $0xb80] sm:$0xff]
    %v412 = vld [vmem:[%s1 + $0xb88] sm:$0xff]
    %v413 = vld [vmem:[%s1 + $0xb90] sm:$0xff]
    %v414 = vld [vmem:[%s1 + $0xb98] sm:$0xff]
    %v415 = vld [vmem:[%s1 + $0xba0] sm:$0xff]
    %v416 = vld [vmem:[%s1 + $0xba8] sm:$0xff]
    %v417 = vld [vmem:[%s1 + $0xbb0] sm:$0xff]
    %v418 = vld [vmem:[%s1 + $0xbb8] sm:$0xff]
    %v419 = vld [vmem:[%s1 + $0xbc0] sm:$0xff]
    %v420 = vld [vmem:[%s1 + $0xbc8] sm:$0xff]
    %v421 = vld [vmem:[%s1 + $0xbd0] sm:$0xff]
    %v422 = vld [vmem:[%s1 + $0xbd8] sm:$0xff]
    %v423 = vld [vmem:[%s1 + $0xbe0] sm:$0xff]
    %v424 = vld [vmem:[%s1 + $0xbe8] sm:$0xff]
    %v425 = vld [vmem:[%s1 + $0xbf0] sm:$0xff]
    %v426 = vld [vmem:[%s1 + $0xbf8] sm:$0xff]
    %v427 = vld [vmem:[%s1 + $0xc00] sm:$0xff]
    %v428 = vld [vmem:[%s1 + $0xc08] sm:$0xff]
    %v429 = vld [vmem:[%s1 + $0xc10] sm:$0xff]
    %v430 = vld [vmem:[%s1 + $0xc18] sm:$0xff]
    %v431 = vld [vmem:[%s1 + $0xc20] sm:$0xff]
    %v432 = vld [vmem:[%s1 + $0xc28] sm:$0xff]
    %v433 = vld [vmem:[%s1 + $0xc30] sm:$0xff]
    %v434 = vld [vmem:[%s1 + $0xc38] sm:$0xff]
    %v435 = vld [vmem:[%s2] sm:$0xf]
    %v437 = vlaneseq
    %v438 = vshrl.u32 %v437, 7
    %v439 = vsub.s32 0, %v438
    %v440 = vrot.slane %v435, %v439
    %v441 = vlaneseq
    %v442 = vshrl.u32 %v441, 7
    %v443 = vsub.s32 1, %v442
    %v444 = vrot.slane %v435, %v443
    %v445 = vlaneseq
    %v446 = vshrl.u32 %v445, 7
    %v447 = vsub.s32 2, %v446
    %v448 = vrot.slane %v435, %v447
    %v449 = vlaneseq
    %v450 = vshrl.u32 %v449, 7
    %v451 = vsub.s32 3, %v450
    %v452 = vrot.slane %v435, %v451
    %vm457 = vcmask 130048
    %v459 = vsel %vm457, %v42, 0
    %461 = vmatprep.subr.mxu0 %v104
    %462 = vmatpush1.msra.mxu0 %v103
    %463 = vmatprep.subr.mxu0 %v100
    %464 = vmatpush1.msra.mxu0 %v99
    %465 = vmatprep.subr.mxu0 %v96
    %466 = vmatpush1.msra.mxu0 %v95
    %467 = vmatprep.subr.mxu0 %v92
    %468 = vmatpush1.msra.mxu0 %v91
    %469 = vmatprep.subr.mxu0 %v88
    %470 = vmatpush1.msra.mxu0 %v87
    %471 = vmatprep.subr.mxu0 %v84
    %472 = vmatpush1.msra.mxu0 %v83
    %473 = vmatprep.subr.mxu0 %v80
    %474 = vmatpush1.msra.mxu0 %v79
    %475 = vmatprep.subr.mxu0 %v76
    %476 = vmatpush1.msra.mxu0 %v75
    %477 = vmatprep.subr.mxu0 %v72
    %478 = vmatpush1.msra.mxu0 %v71
    %479 = vmatprep.subr.mxu0 %v68
    %480 = vmatpush1.msra.mxu0 %v67
    %481 = vmatprep.subr.mxu0 %v64
    %482 = vmatpush1.msra.mxu0 %v63
    %483 = vmatprep.subr.mxu0 %v60
    %484 = vmatpush1.msra.mxu0 %v59
    %485 = vmatprep.subr.mxu0 %v56
    %486 = vmatpush1.msra.mxu0 %v55
    %487 = vmatprep.subr.mxu0 %v52
    %488 = vmatpush1.msra.mxu0 %v51
    %489 = vmatprep.subr.mxu0 %v48
    %490 = vmatpush1.msra.mxu0 %v47
    %491 = vmatprep.subr.mxu0 %v44
    %492 = vmatpush1.msra.mxu0 %v43
    %493 = vmatprep.subr.mxu0 %v168
    %494 = vmatpush2.msra.mxu0 %v167
    %495 = vmatprep.subr.mxu0 %v164
    %496 = vmatpush2.msra.mxu0 %v163
    %497 = vmatprep.subr.mxu0 %v160
    %498 = vmatpush2.msra.mxu0 %v159
    %499 = vmatprep.subr.mxu0 %v156
    %500 = vmatpush2.msra.mxu0 %v155
    %501 = vmatprep.subr.mxu0 %v152
    %502 = vmatpush2.msra.mxu0 %v151
    %503 = vmatprep.subr.mxu0 %v148
    %504 = vmatpush2.msra.mxu0 %v147
    %505 = vmatprep.subr.mxu0 %v144
    %506 = vmatpush2.msra.mxu0 %v143
    %507 = vmatprep.subr.mxu0 %v140
    %508 = vmatpush2.msra.mxu0 %v139
    %509 = vmatprep.subr.mxu0 %v136
    %510 = vmatpush2.msra.mxu0 %v135
    %511 = vmatprep.subr.mxu0 %v132
    %512 = vmatpush2.msra.mxu0 %v131
    %513 = vmatprep.subr.mxu0 %v128
    %514 = vmatpush2.msra.mxu0 %v127
    %515 = vmatprep.subr.mxu0 %v124
    %516 = vmatpush2.msra.mxu0 %v123
    %517 = vmatprep.subr.mxu0 %v120
    %518 = vmatpush2.msra.mxu0 %v119
    %519 = vmatprep.subr.mxu0 %v116
    %520 = vmatpush2.msra.mxu0 %v115
    %521 = vmatprep.subr.mxu0 %v112
    %522 = vmatpush2.msra.mxu0 %v111
    %523 = vmatprep.subr.mxu0 %v108
    %524 = vmatpush2.msra.mxu0 %v107
    %525 = vmatprep.mubr.f32.mxu0 %v37
    %526 = vmatmul.mubr.f32.gmra.mxu0 %v36
    %v527 = vpop.f32.mrf.mxu0
    %v528 = vadd.f32 %v440, %v527
    %v529 = vpop.f32.mrf.mxu0
    %v530 = vadd.f32 %v444, %v529
    %531 = vdwg.mxu0
    %532 = vmatprep.subr.mxu0 %v232
    %533 = vmatpush1.msra.mxu0 %v231
    %534 = vmatprep.subr.mxu0 %v228
    %535 = vmatpush1.msra.mxu0 %v227
    %536 = vmatprep.subr.mxu0 %v224
    %537 = vmatpush1.msra.mxu0 %v223
    %538 = vmatprep.subr.mxu0 %v220
    %539 = vmatpush1.msra.mxu0 %v219
    %540 = vmatprep.subr.mxu0 %v216
    %541 = vmatpush1.msra.mxu0 %v215
    %542 = vmatprep.subr.mxu0 %v212
    %543 = vmatpush1.msra.mxu0 %v211
    %544 = vmatprep.subr.mxu0 %v208
    %545 = vmatpush1.msra.mxu0 %v207
    %546 = vmatprep.subr.mxu0 %v204
    %547 = vmatpush1.msra.mxu0 %v203
    %548 = vmatprep.subr.mxu0 %v200
    %549 = vmatpush1.msra.mxu0 %v199
    %550 = vmatprep.subr.mxu0 %v196
    %551 = vmatpush1.msra.mxu0 %v195
    %552 = vmatprep.subr.mxu0 %v192
    %553 = vmatpush1.msra.mxu0 %v191
    %554 = vmatprep.subr.mxu0 %v188
    %555 = vmatpush1.msra.mxu0 %v187
    %556 = vmatprep.subr.mxu0 %v184
    %557 = vmatpush1.msra.mxu0 %v183
    %558 = vmatprep.subr.mxu0 %v180
    %559 = vmatpush1.msra.mxu0 %v179
    %560 = vmatprep.subr.mxu0 %v176
    %561 = vmatpush1.msra.mxu0 %v175
    %562 = vmatprep.subr.mxu0 %v172
    %563 = vmatpush1.msra.mxu0 %v171
    %564 = vmatprep.subr.mxu0 %v296
    %565 = vmatpush2.msra.mxu0 %v295
    %566 = vmatprep.subr.mxu0 %v292
    %567 = vmatpush2.msra.mxu0 %v291
    %568 = vmatprep.subr.mxu0 %v288
    %569 = vmatpush2.msra.mxu0 %v287
    %570 = vmatprep.subr.mxu0 %v284
    %571 = vmatpush2.msra.mxu0 %v283
    %572 = vmatprep.subr.mxu0 %v280
    %573 = vmatpush2.msra.mxu0 %v279
    %574 = vmatprep.subr.mxu0 %v276
    %575 = vmatpush2.msra.mxu0 %v275
    %576 = vmatprep.subr.mxu0 %v272
    %577 = vmatpush2.msra.mxu0 %v271
    %578 = vmatprep.subr.mxu0 %v268
    %579 = vmatpush2.msra.mxu0 %v267
    %580 = vmatprep.subr.mxu0 %v264
    %581 = vmatpush2.msra.mxu0 %v263
    %582 = vmatprep.subr.mxu0 %v260
    %583 = vmatpush2.msra.mxu0 %v259
    %584 = vmatprep.subr.mxu0 %v256
    %585 = vmatpush2.msra.mxu0 %v255
    %586 = vmatprep.subr.mxu0 %v252
    %587 = vmatpush2.msra.mxu0 %v251
    %588 = vmatprep.subr.mxu0 %v248
    %589 = vmatpush2.msra.mxu0 %v247
    %590 = vmatprep.subr.mxu0 %v244
    %591 = vmatpush2.msra.mxu0 %v243
    %592 = vmatprep.subr.mxu0 %v240
    %593 = vmatpush2.msra.mxu0 %v239
    %594 = vmatprep.subr.mxu0 %v236
    %595 = vmatpush2.msra.mxu0 %v235
    %596 = vmatprep.mubr.f32.mxu0 %v39
    %597 = vmatmul.mubr.f32.gmra.mxu0 %v38
    %v598 = vpop.f32.mrf.mxu0
    %v599 = vadd.f32 %v528, %v598
    %v600 = vpop.f32.mrf.mxu0
    %v601 = vadd.f32 %v530, %v600
    %602 = vdwg.mxu0
    %603 = vmatprep.subr.mxu0 %v360
    %604 = vmatpush1.msra.mxu0 %v359
    %605 = vmatprep.subr.mxu0 %v356
    %606 = vmatpush1.msra.mxu0 %v355
    %607 = vmatprep.subr.mxu0 %v352
    %608 = vmatpush1.msra.mxu0 %v351
    %609 = vmatprep.subr.mxu0 %v348
    %610 = vmatpush1.msra.mxu0 %v347
    %611 = vmatprep.subr.mxu0 %v344
    %612 = vmatpush1.msra.mxu0 %v343
    %613 = vmatprep.subr.mxu0 %v340
    %614 = vmatpush1.msra.mxu0 %v339
    %615 = vmatprep.subr.mxu0 %v336
    %616 = vmatpush1.msra.mxu0 %v335
    %617 = vmatprep.subr.mxu0 %v332
    %618 = vmatpush1.msra.mxu0 %v331
    %619 = vmatprep.subr.mxu0 %v328
    %620 = vmatpush1.msra.mxu0 %v327
    %621 = vmatprep.subr.mxu0 %v324
    %622 = vmatpush1.msra.mxu0 %v323
    %623 = vmatprep.subr.mxu0 %v320
    %624 = vmatpush1.msra.mxu0 %v319
    %625 = vmatprep.subr.mxu0 %v316
    %626 = vmatpush1.msra.mxu0 %v315
    %627 = vmatprep.subr.mxu0 %v312
    %628 = vmatpush1.msra.mxu0 %v311
    %629 = vmatprep.subr.mxu0 %v308
    %630 = vmatpush1.msra.mxu0 %v307
    %631 = vmatprep.subr.mxu0 %v304
    %632 = vmatpush1.msra.mxu0 %v303
    %633 = vmatprep.subr.mxu0 %v300
    %634 = vmatpush1.msra.mxu0 %v299
    %635 = vmatprep.subr.mxu0 %v424
    %636 = vmatpush2.msra.mxu0 %v423
    %637 = vmatprep.subr.mxu0 %v420
    %638 = vmatpush2.msra.mxu0 %v419
    %639 = vmatprep.subr.mxu0 %v416
    %640 = vmatpush2.msra.mxu0 %v415
    %641 = vmatprep.subr.mxu0 %v412
    %642 = vmatpush2.msra.mxu0 %v411
    %643 = vmatprep.subr.mxu0 %v408
    %644 = vmatpush2.msra.mxu0 %v407
    %645 = vmatprep.subr.mxu0 %v404
    %646 = vmatpush2.msra.mxu0 %v403
    %647 = vmatprep.subr.mxu0 %v400
    %648 = vmatpush2.msra.mxu0 %v399
    %649 = vmatprep.subr.mxu0 %v396
    %650 = vmatpush2.msra.mxu0 %v395
    %651 = vmatprep.subr.mxu0 %v392
    %652 = vmatpush2.msra.mxu0 %v391
    %653 = vmatprep.subr.mxu0 %v388
    %654 = vmatpush2.msra.mxu0 %v387
    %655 = vmatprep.subr.mxu0 %v384
    %656 = vmatpush2.msra.mxu0 %v383
    %657 = vmatprep.subr.mxu0 %v380
    %658 = vmatpush2.msra.mxu0 %v379
    %659 = vmatprep.subr.mxu0 %v376
    %660 = vmatpush2.msra.mxu0 %v375
    %661 = vmatprep.subr.mxu0 %v372
    %662 = vmatpush2.msra.mxu0 %v371
    %663 = vmatprep.subr.mxu0 %v368
    %664 = vmatpush2.msra.mxu0 %v367
    %665 = vmatprep.subr.mxu0 %v364
    %666 = vmatpush2.msra.mxu0 %v363
    %667 = vmatprep.mubr.f32.mxu0 %v41
    %668 = vmatmul.mubr.f32.gmra.mxu0 %v40
    %v669 = vpop.f32.mrf.mxu0
    %v670 = vadd.f32 %v599, %v669
    %v671 = vpop.f32.mrf.mxu0
    %v672 = vadd.f32 %v601, %v671
    %673 = vdwg.mxu0
    %674 = vmatprep.subr.mxu0 0.0
    %675 = vmatpush1.msra.mxu0 0.0
    %676 = vmatprep.subr.mxu0 0.0
    %677 = vmatpush1.msra.mxu0 0.0
    %678 = vmatprep.subr.mxu0 0.0
    %679 = vmatpush1.msra.mxu0 0.0
    %680 = vmatprep.subr.mxu0 0.0
    %681 = vmatpush1.msra.mxu0 0.0
    %682 = vmatprep.subr.mxu0 0.0
    %683 = vmatpush1.msra.mxu0 0.0
    %684 = vmatprep.subr.mxu0 0.0
    %685 = vmatpush1.msra.mxu0 0.0
    %686 = vmatprep.subr.mxu0 0.0
    %687 = vmatpush1.msra.mxu0 0.0
    %688 = vmatprep.subr.mxu0 0.0
    %689 = vmatpush1.msra.mxu0 0.0
    %690 = vmatprep.subr.mxu0 0.0
    %691 = vmatpush1.msra.mxu0 0.0
    %692 = vmatprep.subr.mxu0 0.0
    %693 = vmatpush1.msra.mxu0 0.0
    %694 = vmatprep.subr.mxu0 0.0
    %695 = vmatpush1.msra.mxu0 0.0
    %696 = vmatprep.subr.mxu0 0.0
    %697 = vmatpush1.msra.mxu0 0.0
    %698 = vmatprep.subr.mxu0 0.0
    %699 = vmatpush1.msra.mxu0 0.0
    %700 = vmatprep.subr.mxu0 0.0
    %701 = vmatpush1.msra.mxu0 0.0
    %702 = vmatprep.subr.mxu0 %v432
    %703 = vmatpush1.msra.mxu0 %v431
    %704 = vmatprep.subr.mxu0 %v428
    %705 = vmatpush1.msra.mxu0 %v427
    %706 = vmatprep.subr.mxu0 0.0
    %707 = vmatpush2.msra.mxu0 0.0
    %708 = vmatprep.subr.mxu0 0.0
    %709 = vmatpush2.msra.mxu0 0.0
    %710 = vmatprep.subr.mxu0 0.0
    %711 = vmatpush2.msra.mxu0 0.0
    %712 = vmatprep.subr.mxu0 0.0
    %713 = vmatpush2.msra.mxu0 0.0
    %714 = vmatprep.subr.mxu0 0.0
    %715 = vmatpush2.msra.mxu0 0.0
    %716 = vmatprep.subr.mxu0 0.0
    %717 = vmatpush2.msra.mxu0 0.0
    %718 = vmatprep.subr.mxu0 0.0
    %719 = vmatpush2.msra.mxu0 0.0
    %720 = vmatprep.subr.mxu0 0.0
    %721 = vmatpush2.msra.mxu0 0.0
    %722 = vmatprep.subr.mxu0 0.0
    %723 = vmatpush2.msra.mxu0 0.0
    %724 = vmatprep.subr.mxu0 0.0
    %725 = vmatpush2.msra.mxu0 0.0
    %726 = vmatprep.subr.mxu0 0.0
    %727 = vmatpush2.msra.mxu0 0.0
    %728 = vmatprep.subr.mxu0 0.0
    %729 = vmatpush2.msra.mxu0 0.0
    %730 = vmatprep.subr.mxu0 0.0
    %731 = vmatpush2.msra.mxu0 0.0
    %732 = vmatprep.subr.mxu0 0.0
    %733 = vmatpush2.msra.mxu0 0.0
    %734 = vmatprep.subr.mxu0 0.0
    %735 = vmatpush2.msra.mxu0 0.0
    %736 = vmatprep.subr.mxu0 0.0
    %737 = vmatpush2.msra.mxu0 0.0
    %738 = vmatprep.mubr.f32.mxu0 0.0
    %739 = vmatmul.mubr.f32.gmra.mxu0 %v459
    %v740 = vpop.f32.mrf.mxu0
    %v741 = vadd.f32 %v670, %v740
    %v742 = vpop.f32.mrf.mxu0
    %v743 = vadd.f32 %v672, %v742
    %744 = vdwg.mxu0
    %745 = vmatprep.subr.mxu0 %v106
    %746 = vmatpush1.msra.mxu0 %v105
    %747 = vmatprep.subr.mxu0 %v102
    %748 = vmatpush1.msra.mxu0 %v101
    %749 = vmatprep.subr.mxu0 %v98
    %750 = vmatpush1.msra.mxu0 %v97
    %751 = vmatprep.subr.mxu0 %v94
    %752 = vmatpush1.msra.mxu0 %v93
    %753 = vmatprep.subr.mxu0 %v90
    %754 = vmatpush1.msra.mxu0 %v89
    %755 = vmatprep.subr.mxu0 %v86
    %756 = vmatpush1.msra.mxu0 %v85
    %757 = vmatprep.subr.mxu0 %v82
    %758 = vmatpush1.msra.mxu0 %v81
    %759 = vmatprep.subr.mxu0 %v78
    %760 = vmatpush1.msra.mxu0 %v77
    %761 = vmatprep.subr.mxu0 %v74
    %762 = vmatpush1.msra.mxu0 %v73
    %763 = vmatprep.subr.mxu0 %v70
    %764 = vmatpush1.msra.mxu0 %v69
    %765 = vmatprep.subr.mxu0 %v66
    %766 = vmatpush1.msra.mxu0 %v65
    %767 = vmatprep.subr.mxu0 %v62
    %768 = vmatpush1.msra.mxu0 %v61
    %769 = vmatprep.subr.mxu0 %v58
    %770 = vmatpush1.msra.mxu0 %v57
    %771 = vmatprep.subr.mxu0 %v54
    %772 = vmatpush1.msra.mxu0 %v53
    %773 = vmatprep.subr.mxu0 %v50
    %774 = vmatpush1.msra.mxu0 %v49
    %775 = vmatprep.subr.mxu0 %v46
    %776 = vmatpush1.msra.mxu0 %v45
    %777 = vmatprep.subr.mxu0 %v170
    %778 = vmatpush2.msra.mxu0 %v169
    %779 = vmatprep.subr.mxu0 %v166
    %780 = vmatpush2.msra.mxu0 %v165
    %781 = vmatprep.subr.mxu0 %v162
    %782 = vmatpush2.msra.mxu0 %v161
    %783 = vmatprep.subr.mxu0 %v158
    %784 = vmatpush2.msra.mxu0 %v157
    %785 = vmatprep.subr.mxu0 %v154
    %786 = vmatpush2.msra.mxu0 %v153
    %787 = vmatprep.subr.mxu0 %v150
    %788 = vmatpush2.msra.mxu0 %v149
    %789 = vmatprep.subr.mxu0 %v146
    %790 = vmatpush2.msra.mxu0 %v145
    %791 = vmatprep.subr.mxu0 %v142
    %792 = vmatpush2.msra.mxu0 %v141
    %793 = vmatprep.subr.mxu0 %v138
    %794 = vmatpush2.msra.mxu0 %v137
    %795 = vmatprep.subr.mxu0 %v134
    %796 = vmatpush2.msra.mxu0 %v133
    %797 = vmatprep.subr.mxu0 %v130
    %798 = vmatpush2.msra.mxu0 %v129
    %799 = vmatprep.subr.mxu0 %v126
    %800 = vmatpush2.msra.mxu0 %v125
    %801 = vmatprep.subr.mxu0 %v122
    %802 = vmatpush2.msra.mxu0 %v121
    %803 = vmatprep.subr.mxu0 %v118
    %804 = vmatpush2.msra.mxu0 %v117
    %805 = vmatprep.subr.mxu0 %v114
    %806 = vmatpush2.msra.mxu0 %v113
    %807 = vmatprep.subr.mxu0 %v110
    %808 = vmatpush2.msra.mxu0 %v109
    %809 = vmatprep.mubr.f32.mxu0 %v37
    %810 = vmatmul.mubr.f32.gmra.mxu0 %v36
    %v811 = vpop.f32.mrf.mxu0
    %v812 = vadd.f32 %v448, %v811
    %v813 = vpop.f32.mrf.mxu0
    %v814 = vadd.f32 %v452, %v813
    %815 = vdwg.mxu0
    %816 = vmatprep.subr.mxu0 %v234
    %817 = vmatpush1.msra.mxu0 %v233
    %818 = vmatprep.subr.mxu0 %v230
    %819 = vmatpush1.msra.mxu0 %v229
    %820 = vmatprep.subr.mxu0 %v226
    %821 = vmatpush1.msra.mxu0 %v225
    %822 = vmatprep.subr.mxu0 %v222
    %823 = vmatpush1.msra.mxu0 %v221
    %824 = vmatprep.subr.mxu0 %v218
    %825 = vmatpush1.msra.mxu0 %v217
    %826 = vmatprep.subr.mxu0 %v214
    %827 = vmatpush1.msra.mxu0 %v213
    %828 = vmatprep.subr.mxu0 %v210
    %829 = vmatpush1.msra.mxu0 %v209
    %830 = vmatprep.subr.mxu0 %v206
    %831 = vmatpush1.msra.mxu0 %v205
    %832 = vmatprep.subr.mxu0 %v202
    %833 = vmatpush1.msra.mxu0 %v201
    %834 = vmatprep.subr.mxu0 %v198
    %835 = vmatpush1.msra.mxu0 %v197
    %836 = vmatprep.subr.mxu0 %v194
    %837 = vmatpush1.msra.mxu0 %v193
    %838 = vmatprep.subr.mxu0 %v190
    %839 = vmatpush1.msra.mxu0 %v189
    %840 = vmatprep.subr.mxu0 %v186
    %841 = vmatpush1.msra.mxu0 %v185
    %842 = vmatprep.subr.mxu0 %v182
    %843 = vmatpush1.msra.mxu0 %v181
    %844 = vmatprep.subr.mxu0 %v178
    %845 = vmatpush1.msra.mxu0 %v177
    %846 = vmatprep.subr.mxu0 %v174
    %847 = vmatpush1.msra.mxu0 %v173
    %848 = vmatprep.subr.mxu0 %v298
    %849 = vmatpush2.msra.mxu0 %v297
    %850 = vmatprep.subr.mxu0 %v294
    %851 = vmatpush2.msra.mxu0 %v293
    %852 = vmatprep.subr.mxu0 %v290
    %853 = vmatpush2.msra.mxu0 %v289
    %854 = vmatprep.subr.mxu0 %v286
    %855 = vmatpush2.msra.mxu0 %v285
    %856 = vmatprep.subr.mxu0 %v282
    %857 = vmatpush2.msra.mxu0 %v281
    %858 = vmatprep.subr.mxu0 %v278
    %859 = vmatpush2.msra.mxu0 %v277
    %860 = vmatprep.subr.mxu0 %v274
    %861 = vmatpush2.msra.mxu0 %v273
    %862 = vmatprep.subr.mxu0 %v270
    %863 = vmatpush2.msra.mxu0 %v269
    %864 = vmatprep.subr.mxu0 %v266
    %865 = vmatpush2.msra.mxu0 %v265
    %866 = vmatprep.subr.mxu0 %v262
    %867 = vmatpush2.msra.mxu0 %v261
    %868 = vmatprep.subr.mxu0 %v258
    %869 = vmatpush2.msra.mxu0 %v257
    %870 = vmatprep.subr.mxu0 %v254
    %871 = vmatpush2.msra.mxu0 %v253
    %872 = vmatprep.subr.mxu0 %v250
    %873 = vmatpush2.msra.mxu0 %v249
    %874 = vmatprep.subr.mxu0 %v246
    %875 = vmatpush2.msra.mxu0 %v245
    %876 = vmatprep.subr.mxu0 %v242
    %877 = vmatpush2.msra.mxu0 %v241
    %878 = vmatprep.subr.mxu0 %v238
    %879 = vmatpush2.msra.mxu0 %v237
    %880 = vmatprep.mubr.f32.mxu0 %v39
    %881 = vmatmul.mubr.f32.gmra.mxu0 %v38
    %v882 = vpop.f32.mrf.mxu0
    %v883 = vadd.f32 %v812, %v882
    %v884 = vpop.f32.mrf.mxu0
    %v885 = vadd.f32 %v814, %v884
    %886 = vdwg.mxu0
    %887 = vmatprep.subr.mxu0 %v362
    %888 = vmatpush1.msra.mxu0 %v361
    %889 = vmatprep.subr.mxu0 %v358
    %890 = vmatpush1.msra.mxu0 %v357
    %891 = vmatprep.subr.mxu0 %v354
    %892 = vmatpush1.msra.mxu0 %v353
    %893 = vmatprep.subr.mxu0 %v350
    %894 = vmatpush1.msra.mxu0 %v349
    %895 = vmatprep.subr.mxu0 %v346
    %896 = vmatpush1.msra.mxu0 %v345
    %897 = vmatprep.subr.mxu0 %v342
    %898 = vmatpush1.msra.mxu0 %v341
    %899 = vmatprep.subr.mxu0 %v338
    %900 = vmatpush1.msra.mxu0 %v337
    %901 = vmatprep.subr.mxu0 %v334
    %902 = vmatpush1.msra.mxu0 %v333
    %903 = vmatprep.subr.mxu0 %v330
    %904 = vmatpush1.msra.mxu0 %v329
    %905 = vmatprep.subr.mxu0 %v326
    %906 = vmatpush1.msra.mxu0 %v325
    %907 = vmatprep.subr.mxu0 %v322
    %908 = vmatpush1.msra.mxu0 %v321
    %909 = vmatprep.subr.mxu0 %v318
    %910 = vmatpush1.msra.mxu0 %v317
    %911 = vmatprep.subr.mxu0 %v314
    %912 = vmatpush1.msra.mxu0 %v313
    %913 = vmatprep.subr.mxu0 %v310
    %914 = vmatpush1.msra.mxu0 %v309
    %915 = vmatprep.subr.mxu0 %v306
    %916 = vmatpush1.msra.mxu0 %v305
    %917 = vmatprep.subr.mxu0 %v302
    %918 = vmatpush1.msra.mxu0 %v301
    %919 = vmatprep.subr.mxu0 %v426
    %920 = vmatpush2.msra.mxu0 %v425
    %921 = vmatprep.subr.mxu0 %v422
    %922 = vmatpush2.msra.mxu0 %v421
    %923 = vmatprep.subr.mxu0 %v418
    %924 = vmatpush2.msra.mxu0 %v417
    %925 = vmatprep.subr.mxu0 %v414
    %926 = vmatpush2.msra.mxu0 %v413
    %927 = vmatprep.subr.mxu0 %v410
    %928 = vmatpush2.msra.mxu0 %v409
    %929 = vmatprep.subr.mxu0 %v406
    %930 = vmatpush2.msra.mxu0 %v405
    %931 = vmatprep.subr.mxu0 %v402
    %932 = vmatpush2.msra.mxu0 %v401
    %933 = vmatprep.subr.mxu0 %v398
    %934 = vmatpush2.msra.mxu0 %v397
    %935 = vmatprep.subr.mxu0 %v394
    %936 = vmatpush2.msra.mxu0 %v393
    %937 = vmatprep.subr.mxu0 %v390
    %938 = vmatpush2.msra.mxu0 %v389
    %939 = vmatprep.subr.mxu0 %v386
    %940 = vmatpush2.msra.mxu0 %v385
    %941 = vmatprep.subr.mxu0 %v382
    %942 = vmatpush2.msra.mxu0 %v381
    %943 = vmatprep.subr.mxu0 %v378
    %944 = vmatpush2.msra.mxu0 %v377
    %945 = vmatprep.subr.mxu0 %v374
    %946 = vmatpush2.msra.mxu0 %v373
    %947 = vmatprep.subr.mxu0 %v370
    %948 = vmatpush2.msra.mxu0 %v369
    %949 = vmatprep.subr.mxu0 %v366
    %950 = vmatpush2.msra.mxu0 %v365
    %951 = vmatprep.mubr.f32.mxu0 %v41
    %952 = vmatmul.mubr.f32.gmra.mxu0 %v40
    %v953 = vpop.f32.mrf.mxu0
    %v954 = vadd.f32 %v883, %v953
    %v955 = vpop.f32.mrf.mxu0
    %v956 = vadd.f32 %v885, %v955
    %957 = vdwg.mxu0
    %958 = vmatprep.subr.mxu0 0.0
    %959 = vmatpush1.msra.mxu0 0.0
    %960 = vmatprep.subr.mxu0 0.0
    %961 = vmatpush1.msra.mxu0 0.0
    %962 = vmatprep.subr.mxu0 0.0
    %963 = vmatpush1.msra.mxu0 0.0
    %964 = vmatprep.subr.mxu0 0.0
    %965 = vmatpush1.msra.mxu0 0.0
    %966 = vmatprep.subr.mxu0 0.0
    %967 = vmatpush1.msra.mxu0 0.0
    %968 = vmatprep.subr.mxu0 0.0
    %969 = vmatpush1.msra.mxu0 0.0
    %970 = vmatprep.subr.mxu0 0.0
    %971 = vmatpush1.msra.mxu0 0.0
    %972 = vmatprep.subr.mxu0 0.0
    %973 = vmatpush1.msra.mxu0 0.0
    %974 = vmatprep.subr.mxu0 0.0
    %975 = vmatpush1.msra.mxu0 0.0
    %976 = vmatprep.subr.mxu0 0.0
    %977 = vmatpush1.msra.mxu0 0.0
    %978 = vmatprep.subr.mxu0 0.0
    %979 = vmatpush1.msra.mxu0 0.0
    %980 = vmatprep.subr.mxu0 0.0
    %981 = vmatpush1.msra.mxu0 0.0
    %982 = vmatprep.subr.mxu0 0.0
    %983 = vmatpush1.msra.mxu0 0.0
    %984 = vmatprep.subr.mxu0 0.0
    %985 = vmatpush1.msra.mxu0 0.0
    %986 = vmatprep.subr.mxu0 %v434
    %987 = vmatpush1.msra.mxu0 %v433
    %988 = vmatprep.subr.mxu0 %v430
    %989 = vmatpush1.msra.mxu0 %v429
    %990 = vmatprep.subr.mxu0 0.0
    %991 = vmatpush2.msra.mxu0 0.0
    %992 = vmatprep.subr.mxu0 0.0
    %993 = vmatpush2.msra.mxu0 0.0
    %994 = vmatprep.subr.mxu0 0.0
    %995 = vmatpush2.msra.mxu0 0.0
    %996 = vmatprep.subr.mxu0 0.0
    %997 = vmatpush2.msra.mxu0 0.0
    %998 = vmatprep.subr.mxu0 0.0
    %999 = vmatpush2.msra.mxu0 0.0
    %1000 = vmatprep.subr.mxu0 0.0
    %1001 = vmatpush2.msra.mxu0 0.0
    %1002 = vmatprep.subr.mxu0 0.0
    %1003 = vmatpush2.msra.mxu0 0.0
    %1004 = vmatprep.subr.mxu0 0.0
    %1005 = vmatpush2.msra.mxu0 0.0
    %1006 = vmatprep.subr.mxu0 0.0
    %1007 = vmatpush2.msra.mxu0 0.0
    %1008 = vmatprep.subr.mxu0 0.0
    %1009 = vmatpush2.msra.mxu0 0.0
    %1010 = vmatprep.subr.mxu0 0.0
    %1011 = vmatpush2.msra.mxu0 0.0
    %1012 = vmatprep.subr.mxu0 0.0
    %1013 = vmatpush2.msra.mxu0 0.0
    %1014 = vmatprep.subr.mxu0 0.0
    %1015 = vmatpush2.msra.mxu0 0.0
    %1016 = vmatprep.subr.mxu0 0.0
    %1017 = vmatpush2.msra.mxu0 0.0
    %1018 = vmatprep.subr.mxu0 0.0
    %1019 = vmatpush2.msra.mxu0 0.0
    %1020 = vmatprep.subr.mxu0 0.0
    %1021 = vmatpush2.msra.mxu0 0.0
    %1022 = vmatprep.mubr.f32.mxu0 0.0
    %1023 = vmatmul.mubr.f32.gmra.mxu0 %v459
    %v1024 = vpop.f32.mrf.mxu0
    %v1025 = vadd.f32 %v954, %v1024
    %v1026 = vpop.f32.mrf.mxu0
    %v1027 = vadd.f32 %v956, %v1026
    %1028 = vdwg.mxu0
    %v1029 = vmax.f32 %v741, 0.0
    %v1030 = vmax.f32 %v743, 0.0
    %v1031 = vmax.f32 %v1025, 0.0
    %v1032 = vmax.f32 %v1027, 0.0
    %v1033 = vld [vmem:[%s3] sm:$0xff]
    %v1034 = vld [vmem:[%s3 + $0x8] sm:$0xff]
    %v1035 = vld [vmem:[%s3 + $0x10] sm:$0xff]
    %v1036 = vld [vmem:[%s3 + $0x18] sm:$0xff]
    %v1037 = vld [vmem:[%s3 + $0x20] sm:$0xff]
    %v1038 = vld [vmem:[%s3 + $0x28] sm:$0xff]
    %v1039 = vld [vmem:[%s3 + $0x30] sm:$0xff]
    %v1040 = vld [vmem:[%s3 + $0x38] sm:$0xff]
    %v1041 = vld [vmem:[%s3 + $0x40] sm:$0xff]
    %v1042 = vld [vmem:[%s3 + $0x48] sm:$0xff]
    %v1043 = vld [vmem:[%s3 + $0x50] sm:$0xff]
    %v1044 = vld [vmem:[%s3 + $0x58] sm:$0xff]
    %v1045 = vld [vmem:[%s3 + $0x60] sm:$0xff]
    %v1046 = vld [vmem:[%s3 + $0x68] sm:$0xff]
    %v1047 = vld [vmem:[%s3 + $0x70] sm:$0xff]
    %v1048 = vld [vmem:[%s3 + $0x78] sm:$0xff]
    %v1049 = vld [vmem:[%s3 + $0x80] sm:$0xff]
    %v1050 = vld [vmem:[%s3 + $0x88] sm:$0xff]
    %v1051 = vld [vmem:[%s3 + $0x90] sm:$0xff]
    %v1052 = vld [vmem:[%s3 + $0x98] sm:$0xff]
    %v1053 = vld [vmem:[%s3 + $0xa0] sm:$0xff]
    %v1054 = vld [vmem:[%s3 + $0xa8] sm:$0xff]
    %v1055 = vld [vmem:[%s3 + $0xb0] sm:$0xff]
    %v1056 = vld [vmem:[%s3 + $0xb8] sm:$0xff]
    %v1057 = vld [vmem:[%s3 + $0xc0] sm:$0xff]
    %v1058 = vld [vmem:[%s3 + $0xc8] sm:$0xff]
    %v1059 = vld [vmem:[%s3 + $0xd0] sm:$0xff]
    %v1060 = vld [vmem:[%s3 + $0xd8] sm:$0xff]
    %v1061 = vld [vmem:[%s3 + $0xe0] sm:$0xff]
    %v1062 = vld [vmem:[%s3 + $0xe8] sm:$0xff]
    %v1063 = vld [vmem:[%s3 + $0xf0] sm:$0xff]
    %v1064 = vld [vmem:[%s3 + $0xf8] sm:$0xff]
    %v1065 = vld [vmem:[%s3 + $0x100] sm:$0xff]
    %v1066 = vld [vmem:[%s3 + $0x108] sm:$0xff]
    %v1067 = vld [vmem:[%s3 + $0x110] sm:$0xff]
    %v1068 = vld [vmem:[%s3 + $0x118] sm:$0xff]
    %v1069 = vld [vmem:[%s3 + $0x120] sm:$0xff]
    %v1070 = vld [vmem:[%s3 + $0x128] sm:$0xff]
    %v1071 = vld [vmem:[%s3 + $0x130] sm:$0xff]
    %v1072 = vld [vmem:[%s3 + $0x138] sm:$0xff]
    %v1073 = vld [vmem:[%s3 + $0x140] sm:$0xff]
    %v1074 = vld [vmem:[%s3 + $0x148] sm:$0xff]
    %v1075 = vld [vmem:[%s3 + $0x150] sm:$0xff]
    %v1076 = vld [vmem:[%s3 + $0x158] sm:$0xff]
    %v1077 = vld [vmem:[%s3 + $0x160] sm:$0xff]
    %v1078 = vld [vmem:[%s3 + $0x168] sm:$0xff]
    %v1079 = vld [vmem:[%s3 + $0x170] sm:$0xff]
    %v1080 = vld [vmem:[%s3 + $0x178] sm:$0xff]
    %v1081 = vld [vmem:[%s3 + $0x180] sm:$0xff]
    %v1082 = vld [vmem:[%s3 + $0x188] sm:$0xff]
    %v1083 = vld [vmem:[%s3 + $0x190] sm:$0xff]
    %v1084 = vld [vmem:[%s3 + $0x198] sm:$0xff]
    %v1085 = vld [vmem:[%s3 + $0x1a0] sm:$0xff]
    %v1086 = vld [vmem:[%s3 + $0x1a8] sm:$0xff]
    %v1087 = vld [vmem:[%s3 + $0x1b0] sm:$0xff]
    %v1088 = vld [vmem:[%s3 + $0x1b8] sm:$0xff]
    %v1089 = vld [vmem:[%s3 + $0x1c0] sm:$0xff]
    %v1090 = vld [vmem:[%s3 + $0x1c8] sm:$0xff]
    %v1091 = vld [vmem:[%s3 + $0x1d0] sm:$0xff]
    %v1092 = vld [vmem:[%s3 + $0x1d8] sm:$0xff]
    %v1093 = vld [vmem:[%s3 + $0x1e0] sm:$0xff]
    %v1094 = vld [vmem:[%s3 + $0x1e8] sm:$0xff]
    %v1095 = vld [vmem:[%s3 + $0x1f0] sm:$0xff]
    %v1096 = vld [vmem:[%s3 + $0x1f8] sm:$0xff]
    %v1097 = vld [vmem:[%s4] sm:$0x1]
    %v1099 = vlaneseq
    %v1100 = vshrl.u32 %v1099, 7
    %v1101 = vsub.s32 0, %v1100
    %v1102 = vrot.slane %v1097, %v1101
    %1104 = vmatprep.subr.mxu0 0.0
    %1105 = vmatpush1.msra.mxu0 %v1048
    %1106 = vmatprep.subr.mxu0 0.0
    %1107 = vmatpush1.msra.mxu0 %v1047
    %1108 = vmatprep.subr.mxu0 0.0
    %1109 = vmatpush1.msra.mxu0 %v1046
    %1110 = vmatprep.subr.mxu0 0.0
    %1111 = vmatpush1.msra.mxu0 %v1045
    %1112 = vmatprep.subr.mxu0 0.0
    %1113 = vmatpush1.msra.mxu0 %v1044
    %1114 = vmatprep.subr.mxu0 0.0
    %1115 = vmatpush1.msra.mxu0 %v1043
    %1116 = vmatprep.subr.mxu0 0.0
    %1117 = vmatpush1.msra.mxu0 %v1042
    %1118 = vmatprep.subr.mxu0 0.0
    %1119 = vmatpush1.msra.mxu0 %v1041
    %1120 = vmatprep.subr.mxu0 0.0
    %1121 = vmatpush1.msra.mxu0 %v1040
    %1122 = vmatprep.subr.mxu0 0.0
    %1123 = vmatpush1.msra.mxu0 %v1039
    %1124 = vmatprep.subr.mxu0 0.0
    %1125 = vmatpush1.msra.mxu0 %v1038
    %1126 = vmatprep.subr.mxu0 0.0
    %1127 = vmatpush1.msra.mxu0 %v1037
    %1128 = vmatprep.subr.mxu0 0.0
    %1129 = vmatpush1.msra.mxu0 %v1036
    %1130 = vmatprep.subr.mxu0 0.0
    %1131 = vmatpush1.msra.mxu0 %v1035
    %1132 = vmatprep.subr.mxu0 0.0
    %1133 = vmatpush1.msra.mxu0 %v1034
    %1134 = vmatprep.subr.mxu0 0.0
    %1135 = vmatpush1.msra.mxu0 %v1033
    %1136 = vmatprep.subr.mxu0 0.0
    %1137 = vmatpush2.msra.mxu0 %v1064
    %1138 = vmatprep.subr.mxu0 0.0
    %1139 = vmatpush2.msra.mxu0 %v1063
    %1140 = vmatprep.subr.mxu0 0.0
    %1141 = vmatpush2.msra.mxu0 %v1062
    %1142 = vmatprep.subr.mxu0 0.0
    %1143 = vmatpush2.msra.mxu0 %v1061
    %1144 = vmatprep.subr.mxu0 0.0
    %1145 = vmatpush2.msra.mxu0 %v1060
    %1146 = vmatprep.subr.mxu0 0.0
    %1147 = vmatpush2.msra.mxu0 %v1059
    %1148 = vmatprep.subr.mxu0 0.0
    %1149 = vmatpush2.msra.mxu0 %v1058
    %1150 = vmatprep.subr.mxu0 0.0
    %1151 = vmatpush2.msra.mxu0 %v1057
    %1152 = vmatprep.subr.mxu0 0.0
    %1153 = vmatpush2.msra.mxu0 %v1056
    %1154 = vmatprep.subr.mxu0 0.0
    %1155 = vmatpush2.msra.mxu0 %v1055
    %1156 = vmatprep.subr.mxu0 0.0
    %1157 = vmatpush2.msra.mxu0 %v1054
    %1158 = vmatprep.subr.mxu0 0.0
    %1159 = vmatpush2.msra.mxu0 %v1053
    %1160 = vmatprep.subr.mxu0 0.0
    %1161 = vmatpush2.msra.mxu0 %v1052
    %1162 = vmatprep.subr.mxu0 0.0
    %1163 = vmatpush2.msra.mxu0 %v1051
    %1164 = vmatprep.subr.mxu0 0.0
    %1165 = vmatpush2.msra.mxu0 %v1050
    %1166 = vmatprep.subr.mxu0 0.0
    %1167 = vmatpush2.msra.mxu0 %v1049
    %1168 = vmatprep.mubr.f32.mxu0 %v1030
    %1169 = vmatmul.mubr.f32.gmra.mxu0 %v1029
    %v1170 = vpop.f32.mrf.mxu0
    %v1171 = vadd.f32 %v1102, %v1170
    %v1172 = vpop.f32.mrf.mxu0
    %1173 = vdwg.mxu0
    %1174 = vmatprep.subr.mxu0 0.0
    %1175 = vmatpush1.msra.mxu0 %v1080
    %1176 = vmatprep.subr.mxu0 0.0
    %1177 = vmatpush1.msra.mxu0 %v1079
    %1178 = vmatprep.subr.mxu0 0.0
    %1179 = vmatpush1.msra.mxu0 %v1078
    %1180 = vmatprep.subr.mxu0 0.0
    %1181 = vmatpush1.msra.mxu0 %v1077
    %1182 = vmatprep.subr.mxu0 0.0
    %1183 = vmatpush1.msra.mxu0 %v1076
    %1184 = vmatprep.subr.mxu0 0.0
    %1185 = vmatpush1.msra.mxu0 %v1075
    %1186 = vmatprep.subr.mxu0 0.0
    %1187 = vmatpush1.msra.mxu0 %v1074
    %1188 = vmatprep.subr.mxu0 0.0
    %1189 = vmatpush1.msra.mxu0 %v1073
    %1190 = vmatprep.subr.mxu0 0.0
    %1191 = vmatpush1.msra.mxu0 %v1072
    %1192 = vmatprep.subr.mxu0 0.0
    %1193 = vmatpush1.msra.mxu0 %v1071
    %1194 = vmatprep.subr.mxu0 0.0
    %1195 = vmatpush1.msra.mxu0 %v1070
    %1196 = vmatprep.subr.mxu0 0.0
    %1197 = vmatpush1.msra.mxu0 %v1069
    %1198 = vmatprep.subr.mxu0 0.0
    %1199 = vmatpush1.msra.mxu0 %v1068
    %1200 = vmatprep.subr.mxu0 0.0
    %1201 = vmatpush1.msra.mxu0 %v1067
    %1202 = vmatprep.subr.mxu0 0.0
    %1203 = vmatpush1.msra.mxu0 %v1066
    %1204 = vmatprep.subr.mxu0 0.0
    %1205 = vmatpush1.msra.mxu0 %v1065
    %1206 = vmatprep.subr.mxu0 0.0
    %1207 = vmatpush2.msra.mxu0 %v1096
    %1208 = vmatprep.subr.mxu0 0.0
    %1209 = vmatpush2.msra.mxu0 %v1095
    %1210 = vmatprep.subr.mxu0 0.0
    %1211 = vmatpush2.msra.mxu0 %v1094
    %1212 = vmatprep.subr.mxu0 0.0
    %1213 = vmatpush2.msra.mxu0 %v1093
    %1214 = vmatprep.subr.mxu0 0.0
    %1215 = vmatpush2.msra.mxu0 %v1092
    %1216 = vmatprep.subr.mxu0 0.0
    %1217 = vmatpush2.msra.mxu0 %v1091
    %1218 = vmatprep.subr.mxu0 0.0
    %1219 = vmatpush2.msra.mxu0 %v1090
    %1220 = vmatprep.subr.mxu0 0.0
    %1221 = vmatpush2.msra.mxu0 %v1089
    %1222 = vmatprep.subr.mxu0 0.0
    %1223 = vmatpush2.msra.mxu0 %v1088
    %1224 = vmatprep.subr.mxu0 0.0
    %1225 = vmatpush2.msra.mxu0 %v1087
    %1226 = vmatprep.subr.mxu0 0.0
    %1227 = vmatpush2.msra.mxu0 %v1086
    %1228 = vmatprep.subr.mxu0 0.0
    %1229 = vmatpush2.msra.mxu0 %v1085
    %1230 = vmatprep.subr.mxu0 0.0
    %1231 = vmatpush2.msra.mxu0 %v1084
    %1232 = vmatprep.subr.mxu0 0.0
    %1233 = vmatpush2.msra.mxu0 %v1083
    %1234 = vmatprep.subr.mxu0 0.0
    %1235 = vmatpush2.msra.mxu0 %v1082
    %1236 = vmatprep.subr.mxu0 0.0
    %1237 = vmatpush2.msra.mxu0 %v1081
    %1238 = vmatprep.mubr.f32.mxu0 %v1032
    %1239 = vmatmul.mubr.f32.gmra.mxu0 %v1031
    %v1240 = vpop.f32.mrf.mxu0
    %v1241 = vadd.f32 %v1171, %v1240
    %v1242 = vpop.f32.mrf.mxu0
    %1243 = vdwg.mxu0
    %v1244 = vmax.f32 %v1241, 0.0
    %1245 = vst [vmem:[#allocation4] sm:$0xff] %v1244
    %v1246 = vld [vmem:[%s5] sm:$0xff]
    %v1247 = vld [vmem:[%s5 + $0x8] sm:$0xff]
    %v1248 = vld [vmem:[%s5 + $0x10] sm:$0xff]
    %v1249 = vld [vmem:[%s5 + $0x18] sm:$0xff]
    %v1250 = vld [vmem:[%s5 + $0x20] sm:$0xff]
    %v1251 = vld [vmem:[%s5 + $0x28] sm:$0xff]
    %v1252 = vld [vmem:[%s5 + $0x30] sm:$0xff]
    %v1253 = vld [vmem:[%s5 + $0x38] sm:$0xff]
    %v1254 = vld [vmem:[%s5 + $0x40] sm:$0xff]
    %v1255 = vld [vmem:[%s5 + $0x48] sm:$0xff]
    %v1256 = vld [vmem:[%s5 + $0x50] sm:$0xff]
    %v1257 = vld [vmem:[%s5 + $0x58] sm:$0xff]
    %v1258 = vld [vmem:[%s5 + $0x60] sm:$0xff]
    %v1259 = vld [vmem:[%s5 + $0x68] sm:$0xff]
    %v1260 = vld [vmem:[%s5 + $0x70] sm:$0xff]
    %v1261 = vld [vmem:[%s5 + $0x78] sm:$0xff]
    %v1262 = vld [vmem:[%s5 + $0x80] sm:$0xff]
    %v1263 = vld [vmem:[%s5 + $0x88] sm:$0xff]
    %v1264 = vld [vmem:[%s5 + $0x90] sm:$0xff]
    %v1265 = vld [vmem:[%s5 + $0x98] sm:$0xff]
    %v1266 = vld [vmem:[%s5 + $0xa0] sm:$0xff]
    %v1267 = vld [vmem:[%s5 + $0xa8] sm:$0xff]
    %v1268 = vld [vmem:[%s5 + $0xb0] sm:$0xff]
    %v1269 = vld [vmem:[%s5 + $0xb8] sm:$0xff]
    %v1270 = vld [vmem:[%s5 + $0xc0] sm:$0xff]
    %v1271 = vld [vmem:[%s5 + $0xc8] sm:$0xff]
    %v1272 = vld [vmem:[%s5 + $0xd0] sm:$0xff]
    %v1273 = vld [vmem:[%s5 + $0xd8] sm:$0xff]
    %v1274 = vld [vmem:[%s5 + $0xe0] sm:$0xff]
    %v1275 = vld [vmem:[%s5 + $0xe8] sm:$0xff]
    %v1276 = vld [vmem:[%s5 + $0xf0] sm:$0xff]
    %v1277 = vld [vmem:[%s5 + $0xf8] sm:$0xff]
    %v1278 = vld [vmem:[%s5 + $0x100] sm:$0xff]
    %v1279 = vld [vmem:[%s5 + $0x108] sm:$0xff]
    %v1280 = vld [vmem:[%s5 + $0x110] sm:$0xff]
    %v1281 = vld [vmem:[%s5 + $0x118] sm:$0xff]
    %v1282 = vld [vmem:[%s5 + $0x120] sm:$0xff]
    %v1283 = vld [vmem:[%s5 + $0x128] sm:$0xff]
    %v1284 = vld [vmem:[%s5 + $0x130] sm:$0xff]
    %v1285 = vld [vmem:[%s5 + $0x138] sm:$0xff]
    %v1286 = vld [vmem:[%s5 + $0x140] sm:$0xff]
    %v1287 = vld [vmem:[%s5 + $0x148] sm:$0xff]
    %v1288 = vld [vmem:[%s5 + $0x150] sm:$0xff]
    %v1289 = vld [vmem:[%s5 + $0x158] sm:$0xff]
    %v1290 = vld [vmem:[%s5 + $0x160] sm:$0xff]
    %v1291 = vld [vmem:[%s5 + $0x168] sm:$0xff]
    %v1292 = vld [vmem:[%s5 + $0x170] sm:$0xff]
    %v1293 = vld [vmem:[%s5 + $0x178] sm:$0xff]
    %v1294 = vld [vmem:[%s5 + $0x180] sm:$0xff]
    %v1295 = vld [vmem:[%s5 + $0x188] sm:$0xff]
    %v1296 = vld [vmem:[%s5 + $0x190] sm:$0xff]
    %v1297 = vld [vmem:[%s5 + $0x198] sm:$0xff]
    %v1298 = vld [vmem:[%s5 + $0x1a0] sm:$0xff]
    %v1299 = vld [vmem:[%s5 + $0x1a8] sm:$0xff]
    %v1300 = vld [vmem:[%s5 + $0x1b0] sm:$0xff]
    %v1301 = vld [vmem:[%s5 + $0x1b8] sm:$0xff]
    %v1302 = vld [vmem:[%s5 + $0x1c0] sm:$0xff]
    %v1303 = vld [vmem:[%s5 + $0x1c8] sm:$0xff]
    %v1304 = vld [vmem:[%s5 + $0x1d0] sm:$0xff]
    %v1305 = vld [vmem:[%s5 + $0x1d8] sm:$0xff]
    %v1306 = vld [vmem:[%s5 + $0x1e0] sm:$0xff]
    %v1307 = vld [vmem:[%s5 + $0x1e8] sm:$0xff]
    %v1308 = vld [vmem:[%s5 + $0x1f0] sm:$0xff]
    %v1309 = vld [vmem:[%s5 + $0x1f8] sm:$0xff]
    %v1310 = vld [vmem:[%s6] sm:$0xf]
    %v1312 = vlaneseq
    %v1313 = vshrl.u32 %v1312, 7
    %v1314 = vsub.s32 0, %v1313
    %v1315 = vrot.slane %v1310, %v1314
    %v1316 = vlaneseq
    %v1317 = vshrl.u32 %v1316, 7
    %v1318 = vsub.s32 1, %v1317
    %v1319 = vrot.slane %v1310, %v1318
    %v1320 = vlaneseq
    %v1321 = vshrl.u32 %v1320, 7
    %v1322 = vsub.s32 2, %v1321
    %v1323 = vrot.slane %v1310, %v1322
    %v1324 = vlaneseq
    %v1325 = vshrl.u32 %v1324, 7
    %v1326 = vsub.s32 3, %v1325
    %v1327 = vrot.slane %v1310, %v1326
    %1332 = vmatprep.subr.mxu0 %v1307
    %1333 = vmatpush1.msra.mxu0 %v1306
    %1334 = vmatprep.subr.mxu0 %v1303
    %1335 = vmatpush1.msra.mxu0 %v1302
    %1336 = vmatprep.subr.mxu0 %v1299
    %1337 = vmatpush1.msra.mxu0 %v1298
    %1338 = vmatprep.subr.mxu0 %v1295
    %1339 = vmatpush1.msra.mxu0 %v1294
    %1340 = vmatprep.subr.mxu0 %v1291
    %1341 = vmatpush1.msra.mxu0 %v1290
    %1342 = vmatprep.subr.mxu0 %v1287
    %1343 = vmatpush1.msra.mxu0 %v1286
    %1344 = vmatprep.subr.mxu0 %v1283
    %1345 = vmatpush1.msra.mxu0 %v1282
    %1346 = vmatprep.subr.mxu0 %v1279
    %1347 = vmatpush1.msra.mxu0 %v1278
    %1348 = vmatprep.subr.mxu0 %v1275
    %1349 = vmatpush1.msra.mxu0 %v1274
    %1350 = vmatprep.subr.mxu0 %v1271
    %1351 = vmatpush1.msra.mxu0 %v1270
    %1352 = vmatprep.subr.mxu0 %v1267
    %1353 = vmatpush1.msra.mxu0 %v1266
    %1354 = vmatprep.subr.mxu0 %v1263
    %1355 = vmatpush1.msra.mxu0 %v1262
    %1356 = vmatprep.subr.mxu0 %v1259
    %1357 = vmatpush1.msra.mxu0 %v1258
    %1358 = vmatprep.subr.mxu0 %v1255
    %1359 = vmatpush1.msra.mxu0 %v1254
    %1360 = vmatprep.subr.mxu0 %v1251
    %1361 = vmatpush1.msra.mxu0 %v1250
    %1362 = vmatprep.subr.mxu0 %v1247
    %1363 = vmatpush1.msra.mxu0 %v1246
    %1364 = vmatprep.subr.mxu0 0.0
    %1365 = vmatpush2.msra.mxu0 0.0
    %1366 = vmatprep.subr.mxu0 0.0
    %1367 = vmatpush2.msra.mxu0 0.0
    %1368 = vmatprep.subr.mxu0 0.0
    %1369 = vmatpush2.msra.mxu0 0.0
    %1370 = vmatprep.subr.mxu0 0.0
    %1371 = vmatpush2.msra.mxu0 0.0
    %1372 = vmatprep.subr.mxu0 0.0
    %1373 = vmatpush2.msra.mxu0 0.0
    %1374 = vmatprep.subr.mxu0 0.0
    %1375 = vmatpush2.msra.mxu0 0.0
    %1376 = vmatprep.subr.mxu0 0.0
    %1377 = vmatpush2.msra.mxu0 0.0
    %1378 = vmatprep.subr.mxu0 0.0
    %1379 = vmatpush2.msra.mxu0 0.0
    %1380 = vmatprep.subr.mxu0 0.0
    %1381 = vmatpush2.msra.mxu0 0.0
    %1382 = vmatprep.subr.mxu0 0.0
    %1383 = vmatpush2.msra.mxu0 0.0
    %1384 = vmatprep.subr.mxu0 0.0
    %1385 = vmatpush2.msra.mxu0 0.0
    %1386 = vmatprep.subr.mxu0 0.0
    %1387 = vmatpush2.msra.mxu0 0.0
    %1388 = vmatprep.subr.mxu0 0.0
    %1389 = vmatpush2.msra.mxu0 0.0
    %1390 = vmatprep.subr.mxu0 0.0
    %1391 = vmatpush2.msra.mxu0 0.0
    %1392 = vmatprep.subr.mxu0 0.0
    %1393 = vmatpush2.msra.mxu0 0.0
    %1394 = vmatprep.subr.mxu0 0.0
    %1395 = vmatpush2.msra.mxu0 0.0
    %1396 = vmatprep.mubr.f32.mxu0 0.0
    %1397 = vmatmul.mubr.f32.gmra.mxu0 %v1244
    %v1398 = vpop.f32.mrf.mxu0
    %v1399 = vadd.f32 %v1315, %v1398
    %v1400 = vpop.f32.mrf.mxu0
    %v1401 = vadd.f32 %v1319, %v1400
    %1402 = vdwg.mxu0
    %1403 = vmatprep.subr.mxu0 %v1309
    %1404 = vmatpush1.msra.mxu0 %v1308
    %1405 = vmatprep.subr.mxu0 %v1305
    %1406 = vmatpush1.msra.mxu0 %v1304
    %1407 = vmatprep.subr.mxu0 %v1301
    %1408 = vmatpush1.msra.mxu0 %v1300
    %1409 = vmatprep.subr.mxu0 %v1297
    %1410 = vmatpush1.msra.mxu0 %v1296
    %1411 = vmatprep.subr.mxu0 %v1293
    %1412 = vmatpush1.msra.mxu0 %v1292
    %1413 = vmatprep.subr.mxu0 %v1289
    %1414 = vmatpush1.msra.mxu0 %v1288
    %1415 = vmatprep.subr.mxu0 %v1285
    %1416 = vmatpush1.msra.mxu0 %v1284
    %1417 = vmatprep.subr.mxu0 %v1281
    %1418 = vmatpush1.msra.mxu0 %v1280
    %1419 = vmatprep.subr.mxu0 %v1277
    %1420 = vmatpush1.msra.mxu0 %v1276
    %1421 = vmatprep.subr.mxu0 %v1273
    %1422 = vmatpush1.msra.mxu0 %v1272
    %1423 = vmatprep.subr.mxu0 %v1269
    %1424 = vmatpush1.msra.mxu0 %v1268
    %1425 = vmatprep.subr.mxu0 %v1265
    %1426 = vmatpush1.msra.mxu0 %v1264
    %1427 = vmatprep.subr.mxu0 %v1261
    %1428 = vmatpush1.msra.mxu0 %v1260
    %1429 = vmatprep.subr.mxu0 %v1257
    %1430 = vmatpush1.msra.mxu0 %v1256
    %1431 = vmatprep.subr.mxu0 %v1253
    %1432 = vmatpush1.msra.mxu0 %v1252
    %1433 = vmatprep.subr.mxu0 %v1249
    %1434 = vmatpush1.msra.mxu0 %v1248
    %1435 = vmatprep.subr.mxu0 0.0
    %1436 = vmatpush2.msra.mxu0 0.0
    %1437 = vmatprep.subr.mxu0 0.0
    %1438 = vmatpush2.msra.mxu0 0.0
    %1439 = vmatprep.subr.mxu0 0.0
    %1440 = vmatpush2.msra.mxu0 0.0
    %1441 = vmatprep.subr.mxu0 0.0
    %1442 = vmatpush2.msra.mxu0 0.0
    %1443 = vmatprep.subr.mxu0 0.0
    %1444 = vmatpush2.msra.mxu0 0.0
    %1445 = vmatprep.subr.mxu0 0.0
    %1446 = vmatpush2.msra.mxu0 0.0
    %1447 = vmatprep.subr.mxu0 0.0
    %1448 = vmatpush2.msra.mxu0 0.0
    %1449 = vmatprep.subr.mxu0 0.0
    %1450 = vmatpush2.msra.mxu0 0.0
    %1451 = vmatprep.subr.mxu0 0.0
    %1452 = vmatpush2.msra.mxu0 0.0
    %1453 = vmatprep.subr.mxu0 0.0
    %1454 = vmatpush2.msra.mxu0 0.0
    %1455 = vmatprep.subr.mxu0 0.0
    %1456 = vmatpush2.msra.mxu0 0.0
    %1457 = vmatprep.subr.mxu0 0.0
    %1458 = vmatpush2.msra.mxu0 0.0
    %1459 = vmatprep.subr.mxu0 0.0
    %1460 = vmatpush2.msra.mxu0 0.0
    %1461 = vmatprep.subr.mxu0 0.0
    %1462 = vmatpush2.msra.mxu0 0.0
    %1463 = vmatprep.subr.mxu0 0.0
    %1464 = vmatpush2.msra.mxu0 0.0
    %1465 = vmatprep.subr.mxu0 0.0
    %1466 = vmatpush2.msra.mxu0 0.0
    %1467 = vmatprep.mubr.f32.mxu0 0.0
    %1468 = vmatmul.mubr.f32.gmra.mxu0 %v1244
    %v1469 = vpop.f32.mrf.mxu0
    %v1470 = vadd.f32 %v1323, %v1469
    %v1471 = vpop.f32.mrf.mxu0
    %v1472 = vadd.f32 %v1327, %v1471
    %1473 = vdwg.mxu0
    %v1474 = vmax.f32 %v1399, 0.0
    %v1475 = vmax.f32 %v1401, 0.0
    %v1476 = vmax.f32 %v1470, 0.0
    %v1477 = vmax.f32 %v1472, 0.0
    %v1478 = vld [vmem:[%s7] sm:$0xff]
    %v1479 = vld [vmem:[%s7 + $0x8] sm:$0xff]
    %v1480 = vld [vmem:[%s7 + $0x10] sm:$0xff]
    %v1481 = vld [vmem:[%s7 + $0x18] sm:$0xff]
    %v1482 = vld [vmem:[%s7 + $0x20] sm:$0xff]
    %v1483 = vld [vmem:[%s7 + $0x28] sm:$0xff]
    %v1484 = vld [vmem:[%s7 + $0x30] sm:$0xff]
    %v1485 = vld [vmem:[%s7 + $0x38] sm:$0xff]
    %v1486 = vld [vmem:[%s7 + $0x40] sm:$0xff]
    %v1487 = vld [vmem:[%s7 + $0x48] sm:$0xff]
    %v1488 = vld [vmem:[%s7 + $0x50] sm:$0xff]
    %v1489 = vld [vmem:[%s7 + $0x58] sm:$0xff]
    %v1490 = vld [vmem:[%s7 + $0x60] sm:$0xff]
    %v1491 = vld [vmem:[%s7 + $0x68] sm:$0xff]
    %v1492 = vld [vmem:[%s7 + $0x70] sm:$0xff]
    %v1493 = vld [vmem:[%s7 + $0x78] sm:$0xff]
    %v1494 = vld [vmem:[%s7 + $0x80] sm:$0xff]
    %v1495 = vld [vmem:[%s7 + $0x88] sm:$0xff]
    %v1496 = vld [vmem:[%s7 + $0x90] sm:$0xff]
    %v1497 = vld [vmem:[%s7 + $0x98] sm:$0xff]
    %v1498 = vld [vmem:[%s7 + $0xa0] sm:$0xff]
    %v1499 = vld [vmem:[%s7 + $0xa8] sm:$0xff]
    %v1500 = vld [vmem:[%s7 + $0xb0] sm:$0xff]
    %v1501 = vld [vmem:[%s7 + $0xb8] sm:$0xff]
    %v1502 = vld [vmem:[%s7 + $0xc0] sm:$0xff]
    %v1503 = vld [vmem:[%s7 + $0xc8] sm:$0xff]
    %v1504 = vld [vmem:[%s7 + $0xd0] sm:$0xff]
    %v1505 = vld [vmem:[%s7 + $0xd8] sm:$0xff]
    %v1506 = vld [vmem:[%s7 + $0xe0] sm:$0xff]
    %v1507 = vld [vmem:[%s7 + $0xe8] sm:$0xff]
    %v1508 = vld [vmem:[%s7 + $0xf0] sm:$0xff]
    %v1509 = vld [vmem:[%s7 + $0xf8] sm:$0xff]
    %v1510 = vld [vmem:[%s7 + $0x100] sm:$0xff]
    %v1511 = vld [vmem:[%s7 + $0x108] sm:$0xff]
    %v1512 = vld [vmem:[%s7 + $0x110] sm:$0xff]
    %v1513 = vld [vmem:[%s7 + $0x118] sm:$0xff]
    %v1514 = vld [vmem:[%s7 + $0x120] sm:$0xff]
    %v1515 = vld [vmem:[%s7 + $0x128] sm:$0xff]
    %v1516 = vld [vmem:[%s7 + $0x130] sm:$0xff]
    %v1517 = vld [vmem:[%s7 + $0x138] sm:$0xff]
    %v1518 = vld [vmem:[%s7 + $0x140] sm:$0xff]
    %v1519 = vld [vmem:[%s7 + $0x148] sm:$0xff]
    %v1520 = vld [vmem:[%s7 + $0x150] sm:$0xff]
    %v1521 = vld [vmem:[%s7 + $0x158] sm:$0xff]
    %v1522 = vld [vmem:[%s7 + $0x160] sm:$0xff]
    %v1523 = vld [vmem:[%s7 + $0x168] sm:$0xff]
    %v1524 = vld [vmem:[%s7 + $0x170] sm:$0xff]
    %v1525 = vld [vmem:[%s7 + $0x178] sm:$0xff]
    %v1526 = vld [vmem:[%s7 + $0x180] sm:$0xff]
    %v1527 = vld [vmem:[%s7 + $0x188] sm:$0xff]
    %v1528 = vld [vmem:[%s7 + $0x190] sm:$0xff]
    %v1529 = vld [vmem:[%s7 + $0x198] sm:$0xff]
    %v1530 = vld [vmem:[%s7 + $0x1a0] sm:$0xff]
    %v1531 = vld [vmem:[%s7 + $0x1a8] sm:$0xff]
    %v1532 = vld [vmem:[%s7 + $0x1b0] sm:$0xff]
    %v1533 = vld [vmem:[%s7 + $0x1b8] sm:$0xff]
    %v1534 = vld [vmem:[%s7 + $0x1c0] sm:$0xff]
    %v1535 = vld [vmem:[%s7 + $0x1c8] sm:$0xff]
    %v1536 = vld [vmem:[%s7 + $0x1d0] sm:$0xff]
    %v1537 = vld [vmem:[%s7 + $0x1d8] sm:$0xff]
    %v1538 = vld [vmem:[%s7 + $0x1e0] sm:$0xff]
    %v1539 = vld [vmem:[%s7 + $0x1e8] sm:$0xff]
    %v1540 = vld [vmem:[%s7 + $0x1f0] sm:$0xff]
    %v1541 = vld [vmem:[%s7 + $0x1f8] sm:$0xff]
    %v1542 = vld [vmem:[%s7 + $0x200] sm:$0xff]
    %v1543 = vld [vmem:[%s7 + $0x208] sm:$0xff]
    %v1544 = vld [vmem:[%s7 + $0x210] sm:$0xff]
    %v1545 = vld [vmem:[%s7 + $0x218] sm:$0xff]
    %v1546 = vld [vmem:[%s7 + $0x220] sm:$0xff]
    %v1547 = vld [vmem:[%s7 + $0x228] sm:$0xff]
    %v1548 = vld [vmem:[%s7 + $0x230] sm:$0xff]
    %v1549 = vld [vmem:[%s7 + $0x238] sm:$0xff]
    %v1550 = vld [vmem:[%s7 + $0x240] sm:$0xff]
    %v1551 = vld [vmem:[%s7 + $0x248] sm:$0xff]
    %v1552 = vld [vmem:[%s7 + $0x250] sm:$0xff]
    %v1553 = vld [vmem:[%s7 + $0x258] sm:$0xff]
    %v1554 = vld [vmem:[%s7 + $0x260] sm:$0xff]
    %v1555 = vld [vmem:[%s7 + $0x268] sm:$0xff]
    %v1556 = vld [vmem:[%s7 + $0x270] sm:$0xff]
    %v1557 = vld [vmem:[%s7 + $0x278] sm:$0xff]
    %v1558 = vld [vmem:[%s7 + $0x280] sm:$0xff]
    %v1559 = vld [vmem:[%s7 + $0x288] sm:$0xff]
    %v1560 = vld [vmem:[%s7 + $0x290] sm:$0xff]
    %v1561 = vld [vmem:[%s7 + $0x298] sm:$0xff]
    %v1562 = vld [vmem:[%s7 + $0x2a0] sm:$0xff]
    %v1563 = vld [vmem:[%s7 + $0x2a8] sm:$0xff]
    %v1564 = vld [vmem:[%s7 + $0x2b0] sm:$0xff]
    %v1565 = vld [vmem:[%s7 + $0x2b8] sm:$0xff]
    %v1566 = vld [vmem:[%s7 + $0x2c0] sm:$0xff]
    %v1567 = vld [vmem:[%s7 + $0x2c8] sm:$0xff]
    %v1568 = vld [vmem:[%s7 + $0x2d0] sm:$0xff]
    %v1569 = vld [vmem:[%s7 + $0x2d8] sm:$0xff]
    %v1570 = vld [vmem:[%s7 + $0x2e0] sm:$0xff]
    %v1571 = vld [vmem:[%s7 + $0x2e8] sm:$0xff]
    %v1572 = vld [vmem:[%s7 + $0x2f0] sm:$0xff]
    %v1573 = vld [vmem:[%s7 + $0x2f8] sm:$0xff]
    %v1574 = vld [vmem:[%s7 + $0x300] sm:$0xff]
    %v1575 = vld [vmem:[%s7 + $0x308] sm:$0xff]
    %v1576 = vld [vmem:[%s7 + $0x310] sm:$0xff]
    %v1577 = vld [vmem:[%s7 + $0x318] sm:$0xff]
    %v1578 = vld [vmem:[%s7 + $0x320] sm:$0xff]
    %v1579 = vld [vmem:[%s7 + $0x328] sm:$0xff]
    %v1580 = vld [vmem:[%s7 + $0x330] sm:$0xff]
    %v1581 = vld [vmem:[%s7 + $0x338] sm:$0xff]
    %v1582 = vld [vmem:[%s7 + $0x340] sm:$0xff]
    %v1583 = vld [vmem:[%s7 + $0x348] sm:$0xff]
    %v1584 = vld [vmem:[%s7 + $0x350] sm:$0xff]
    %v1585 = vld [vmem:[%s7 + $0x358] sm:$0xff]
    %v1586 = vld [vmem:[%s7 + $0x360] sm:$0xff]
    %v1587 = vld [vmem:[%s7 + $0x368] sm:$0xff]
    %v1588 = vld [vmem:[%s7 + $0x370] sm:$0xff]
    %v1589 = vld [vmem:[%s7 + $0x378] sm:$0xff]
    %v1590 = vld [vmem:[%s7 + $0x380] sm:$0xff]
    %v1591 = vld [vmem:[%s7 + $0x388] sm:$0xff]
    %v1592 = vld [vmem:[%s7 + $0x390] sm:$0xff]
    %v1593 = vld [vmem:[%s7 + $0x398] sm:$0xff]
    %v1594 = vld [vmem:[%s7 + $0x3a0] sm:$0xff]
    %v1595 = vld [vmem:[%s7 + $0x3a8] sm:$0xff]
    %v1596 = vld [vmem:[%s7 + $0x3b0] sm:$0xff]
    %v1597 = vld [vmem:[%s7 + $0x3b8] sm:$0xff]
    %v1598 = vld [vmem:[%s7 + $0x3c0] sm:$0xff]
    %v1599 = vld [vmem:[%s7 + $0x3c8] sm:$0xff]
    %v1600 = vld [vmem:[%s7 + $0x3d0] sm:$0xff]
    %v1601 = vld [vmem:[%s7 + $0x3d8] sm:$0xff]
    %v1602 = vld [vmem:[%s7 + $0x3e0] sm:$0xff]
    %v1603 = vld [vmem:[%s7 + $0x3e8] sm:$0xff]
    %v1604 = vld [vmem:[%s7 + $0x3f0] sm:$0xff]
    %v1605 = vld [vmem:[%s7 + $0x3f8] sm:$0xff]
    %v1606 = vld [vmem:[%s7 + $0x400] sm:$0xff]
    %v1607 = vld [vmem:[%s7 + $0x408] sm:$0xff]
    %v1608 = vld [vmem:[%s7 + $0x410] sm:$0xff]
    %v1609 = vld [vmem:[%s7 + $0x418] sm:$0xff]
    %v1610 = vld [vmem:[%s7 + $0x420] sm:$0xff]
    %v1611 = vld [vmem:[%s7 + $0x428] sm:$0xff]
    %v1612 = vld [vmem:[%s7 + $0x430] sm:$0xff]
    %v1613 = vld [vmem:[%s7 + $0x438] sm:$0xff]
    %v1614 = vld [vmem:[%s7 + $0x440] sm:$0xff]
    %v1615 = vld [vmem:[%s7 + $0x448] sm:$0xff]
    %v1616 = vld [vmem:[%s7 + $0x450] sm:$0xff]
    %v1617 = vld [vmem:[%s7 + $0x458] sm:$0xff]
    %v1618 = vld [vmem:[%s7 + $0x460] sm:$0xff]
    %v1619 = vld [vmem:[%s7 + $0x468] sm:$0xff]
    %v1620 = vld [vmem:[%s7 + $0x470] sm:$0xff]
    %v1621 = vld [vmem:[%s7 + $0x478] sm:$0xff]
    %v1622 = vld [vmem:[%s7 + $0x480] sm:$0xff]
    %v1623 = vld [vmem:[%s7 + $0x488] sm:$0xff]
    %v1624 = vld [vmem:[%s7 + $0x490] sm:$0xff]
    %v1625 = vld [vmem:[%s7 + $0x498] sm:$0xff]
    %v1626 = vld [vmem:[%s7 + $0x4a0] sm:$0xff]
    %v1627 = vld [vmem:[%s7 + $0x4a8] sm:$0xff]
    %v1628 = vld [vmem:[%s7 + $0x4b0] sm:$0xff]
    %v1629 = vld [vmem:[%s7 + $0x4b8] sm:$0xff]
    %v1630 = vld [vmem:[%s7 + $0x4c0] sm:$0xff]
    %v1631 = vld [vmem:[%s7 + $0x4c8] sm:$0xff]
    %v1632 = vld [vmem:[%s7 + $0x4d0] sm:$0xff]
    %v1633 = vld [vmem:[%s7 + $0x4d8] sm:$0xff]
    %v1634 = vld [vmem:[%s7 + $0x4e0] sm:$0xff]
    %v1635 = vld [vmem:[%s7 + $0x4e8] sm:$0xff]
    %v1636 = vld [vmem:[%s7 + $0x4f0] sm:$0xff]
    %v1637 = vld [vmem:[%s7 + $0x4f8] sm:$0xff]
    %v1638 = vld [vmem:[%s7 + $0x500] sm:$0xff]
    %v1639 = vld [vmem:[%s7 + $0x508] sm:$0xff]
    %v1640 = vld [vmem:[%s7 + $0x510] sm:$0xff]
    %v1641 = vld [vmem:[%s7 + $0x518] sm:$0xff]
    %v1642 = vld [vmem:[%s7 + $0x520] sm:$0xff]
    %v1643 = vld [vmem:[%s7 + $0x528] sm:$0xff]
    %v1644 = vld [vmem:[%s7 + $0x530] sm:$0xff]
    %v1645 = vld [vmem:[%s7 + $0x538] sm:$0xff]
    %v1646 = vld [vmem:[%s7 + $0x540] sm:$0xff]
    %v1647 = vld [vmem:[%s7 + $0x548] sm:$0xff]
    %v1648 = vld [vmem:[%s7 + $0x550] sm:$0xff]
    %v1649 = vld [vmem:[%s7 + $0x558] sm:$0xff]
    %v1650 = vld [vmem:[%s7 + $0x560] sm:$0xff]
    %v1651 = vld [vmem:[%s7 + $0x568] sm:$0xff]
    %v1652 = vld [vmem:[%s7 + $0x570] sm:$0xff]
    %v1653 = vld [vmem:[%s7 + $0x578] sm:$0xff]
    %v1654 = vld [vmem:[%s7 + $0x580] sm:$0xff]
    %v1655 = vld [vmem:[%s7 + $0x588] sm:$0xff]
    %v1656 = vld [vmem:[%s7 + $0x590] sm:$0xff]
    %v1657 = vld [vmem:[%s7 + $0x598] sm:$0xff]
    %v1658 = vld [vmem:[%s7 + $0x5a0] sm:$0xff]
    %v1659 = vld [vmem:[%s7 + $0x5a8] sm:$0xff]
    %v1660 = vld [vmem:[%s7 + $0x5b0] sm:$0xff]
    %v1661 = vld [vmem:[%s7 + $0x5b8] sm:$0xff]
    %v1662 = vld [vmem:[%s7 + $0x5c0] sm:$0xff]
    %v1663 = vld [vmem:[%s7 + $0x5c8] sm:$0xff]
    %v1664 = vld [vmem:[%s7 + $0x5d0] sm:$0xff]
    %v1665 = vld [vmem:[%s7 + $0x5d8] sm:$0xff]
    %v1666 = vld [vmem:[%s7 + $0x5e0] sm:$0xff]
    %v1667 = vld [vmem:[%s7 + $0x5e8] sm:$0xff]
    %v1668 = vld [vmem:[%s7 + $0x5f0] sm:$0xff]
    %v1669 = vld [vmem:[%s7 + $0x5f8] sm:$0xff]
    %v1670 = vld [vmem:[%s7 + $0x600] sm:$0xff]
    %v1671 = vld [vmem:[%s7 + $0x608] sm:$0xff]
    %v1672 = vld [vmem:[%s7 + $0x610] sm:$0xff]
    %v1673 = vld [vmem:[%s7 + $0x618] sm:$0xff]
    %v1674 = vld [vmem:[%s7 + $0x620] sm:$0xff]
    %v1675 = vld [vmem:[%s7 + $0x628] sm:$0xff]
    %v1676 = vld [vmem:[%s7 + $0x630] sm:$0xff]
    %v1677 = vld [vmem:[%s7 + $0x638] sm:$0xff]
    %v1678 = vld [vmem:[%s7 + $0x640] sm:$0xff]
    %v1679 = vld [vmem:[%s7 + $0x648] sm:$0xff]
    %v1680 = vld [vmem:[%s7 + $0x650] sm:$0xff]
    %v1681 = vld [vmem:[%s7 + $0x658] sm:$0xff]
    %v1682 = vld [vmem:[%s7 + $0x660] sm:$0xff]
    %v1683 = vld [vmem:[%s7 + $0x668] sm:$0xff]
    %v1684 = vld [vmem:[%s7 + $0x670] sm:$0xff]
    %v1685 = vld [vmem:[%s7 + $0x678] sm:$0xff]
    %v1686 = vld [vmem:[%s7 + $0x680] sm:$0xff]
    %v1687 = vld [vmem:[%s7 + $0x688] sm:$0xff]
    %v1688 = vld [vmem:[%s7 + $0x690] sm:$0xff]
    %v1689 = vld [vmem:[%s7 + $0x698] sm:$0xff]
    %v1690 = vld [vmem:[%s7 + $0x6a0] sm:$0xff]
    %v1691 = vld [vmem:[%s7 + $0x6a8] sm:$0xff]
    %v1692 = vld [vmem:[%s7 + $0x6b0] sm:$0xff]
    %v1693 = vld [vmem:[%s7 + $0x6b8] sm:$0xff]
    %v1694 = vld [vmem:[%s7 + $0x6c0] sm:$0xff]
    %v1695 = vld [vmem:[%s7 + $0x6c8] sm:$0xff]
    %v1696 = vld [vmem:[%s7 + $0x6d0] sm:$0xff]
    %v1697 = vld [vmem:[%s7 + $0x6d8] sm:$0xff]
    %v1698 = vld [vmem:[%s7 + $0x6e0] sm:$0xff]
    %v1699 = vld [vmem:[%s7 + $0x6e8] sm:$0xff]
    %v1700 = vld [vmem:[%s7 + $0x6f0] sm:$0xff]
    %v1701 = vld [vmem:[%s7 + $0x6f8] sm:$0xff]
    %v1702 = vld [vmem:[%s7 + $0x700] sm:$0xff]
    %v1703 = vld [vmem:[%s7 + $0x708] sm:$0xff]
    %v1704 = vld [vmem:[%s7 + $0x710] sm:$0xff]
    %v1705 = vld [vmem:[%s7 + $0x718] sm:$0xff]
    %v1706 = vld [vmem:[%s7 + $0x720] sm:$0xff]
    %v1707 = vld [vmem:[%s7 + $0x728] sm:$0xff]
    %v1708 = vld [vmem:[%s7 + $0x730] sm:$0xff]
    %v1709 = vld [vmem:[%s7 + $0x738] sm:$0xff]
    %v1710 = vld [vmem:[%s7 + $0x740] sm:$0xff]
    %v1711 = vld [vmem:[%s7 + $0x748] sm:$0xff]
    %v1712 = vld [vmem:[%s7 + $0x750] sm:$0xff]
    %v1713 = vld [vmem:[%s7 + $0x758] sm:$0xff]
    %v1714 = vld [vmem:[%s7 + $0x760] sm:$0xff]
    %v1715 = vld [vmem:[%s7 + $0x768] sm:$0xff]
    %v1716 = vld [vmem:[%s7 + $0x770] sm:$0xff]
    %v1717 = vld [vmem:[%s7 + $0x778] sm:$0xff]
    %v1718 = vld [vmem:[%s7 + $0x780] sm:$0xff]
    %v1719 = vld [vmem:[%s7 + $0x788] sm:$0xff]
    %v1720 = vld [vmem:[%s7 + $0x790] sm:$0xff]
    %v1721 = vld [vmem:[%s7 + $0x798] sm:$0xff]
    %v1722 = vld [vmem:[%s7 + $0x7a0] sm:$0xff]
    %v1723 = vld [vmem:[%s7 + $0x7a8] sm:$0xff]
    %v1724 = vld [vmem:[%s7 + $0x7b0] sm:$0xff]
    %v1725 = vld [vmem:[%s7 + $0x7b8] sm:$0xff]
    %v1726 = vld [vmem:[%s7 + $0x7c0] sm:$0xff]
    %v1727 = vld [vmem:[%s7 + $0x7c8] sm:$0xff]
    %v1728 = vld [vmem:[%s7 + $0x7d0] sm:$0xff]
    %v1729 = vld [vmem:[%s7 + $0x7d8] sm:$0xff]
    %v1730 = vld [vmem:[%s7 + $0x7e0] sm:$0xff]
    %v1731 = vld [vmem:[%s7 + $0x7e8] sm:$0xff]
    %v1732 = vld [vmem:[%s7 + $0x7f0] sm:$0xff]
    %v1733 = vld [vmem:[%s7 + $0x7f8] sm:$0xff]
    %v1734 = vld [vmem:[%s7 + $0x800] sm:$0xff]
    %v1735 = vld [vmem:[%s7 + $0x808] sm:$0xff]
    %v1736 = vld [vmem:[%s7 + $0x810] sm:$0xff]
    %v1737 = vld [vmem:[%s7 + $0x818] sm:$0xff]
    %v1738 = vld [vmem:[%s7 + $0x820] sm:$0xff]
    %v1739 = vld [vmem:[%s7 + $0x828] sm:$0xff]
    %v1740 = vld [vmem:[%s7 + $0x830] sm:$0xff]
    %v1741 = vld [vmem:[%s7 + $0x838] sm:$0xff]
    %v1742 = vld [vmem:[%s7 + $0x840] sm:$0xff]
    %v1743 = vld [vmem:[%s7 + $0x848] sm:$0xff]
    %v1744 = vld [vmem:[%s7 + $0x850] sm:$0xff]
    %v1745 = vld [vmem:[%s7 + $0x858] sm:$0xff]
    %v1746 = vld [vmem:[%s7 + $0x860] sm:$0xff]
    %v1747 = vld [vmem:[%s7 + $0x868] sm:$0xff]
    %v1748 = vld [vmem:[%s7 + $0x870] sm:$0xff]
    %v1749 = vld [vmem:[%s7 + $0x878] sm:$0xff]
    %v1750 = vld [vmem:[%s7 + $0x880] sm:$0xff]
    %v1751 = vld [vmem:[%s7 + $0x888] sm:$0xff]
    %v1752 = vld [vmem:[%s7 + $0x890] sm:$0xff]
    %v1753 = vld [vmem:[%s7 + $0x898] sm:$0xff]
    %v1754 = vld [vmem:[%s7 + $0x8a0] sm:$0xff]
    %v1755 = vld [vmem:[%s7 + $0x8a8] sm:$0xff]
    %v1756 = vld [vmem:[%s7 + $0x8b0] sm:$0xff]
    %v1757 = vld [vmem:[%s7 + $0x8b8] sm:$0xff]
    %v1758 = vld [vmem:[%s7 + $0x8c0] sm:$0xff]
    %v1759 = vld [vmem:[%s7 + $0x8c8] sm:$0xff]
    %v1760 = vld [vmem:[%s7 + $0x8d0] sm:$0xff]
    %v1761 = vld [vmem:[%s7 + $0x8d8] sm:$0xff]
    %v1762 = vld [vmem:[%s7 + $0x8e0] sm:$0xff]
    %v1763 = vld [vmem:[%s7 + $0x8e8] sm:$0xff]
    %v1764 = vld [vmem:[%s7 + $0x8f0] sm:$0xff]
    %v1765 = vld [vmem:[%s7 + $0x8f8] sm:$0xff]
    %v1766 = vld [vmem:[%s7 + $0x900] sm:$0xff]
    %v1767 = vld [vmem:[%s7 + $0x908] sm:$0xff]
    %v1768 = vld [vmem:[%s7 + $0x910] sm:$0xff]
    %v1769 = vld [vmem:[%s7 + $0x918] sm:$0xff]
    %v1770 = vld [vmem:[%s7 + $0x920] sm:$0xff]
    %v1771 = vld [vmem:[%s7 + $0x928] sm:$0xff]
    %v1772 = vld [vmem:[%s7 + $0x930] sm:$0xff]
    %v1773 = vld [vmem:[%s7 + $0x938] sm:$0xff]
    %v1774 = vld [vmem:[%s7 + $0x940] sm:$0xff]
    %v1775 = vld [vmem:[%s7 + $0x948] sm:$0xff]
    %v1776 = vld [vmem:[%s7 + $0x950] sm:$0xff]
    %v1777 = vld [vmem:[%s7 + $0x958] sm:$0xff]
    %v1778 = vld [vmem:[%s7 + $0x960] sm:$0xff]
    %v1779 = vld [vmem:[%s7 + $0x968] sm:$0xff]
    %v1780 = vld [vmem:[%s7 + $0x970] sm:$0xff]
    %v1781 = vld [vmem:[%s7 + $0x978] sm:$0xff]
    %v1782 = vld [vmem:[%s7 + $0x980] sm:$0xff]
    %v1783 = vld [vmem:[%s7 + $0x988] sm:$0xff]
    %v1784 = vld [vmem:[%s7 + $0x990] sm:$0xff]
    %v1785 = vld [vmem:[%s7 + $0x998] sm:$0xff]
    %v1786 = vld [vmem:[%s7 + $0x9a0] sm:$0xff]
    %v1787 = vld [vmem:[%s7 + $0x9a8] sm:$0xff]
    %v1788 = vld [vmem:[%s7 + $0x9b0] sm:$0xff]
    %v1789 = vld [vmem:[%s7 + $0x9b8] sm:$0xff]
    %v1790 = vld [vmem:[%s7 + $0x9c0] sm:$0xff]
    %v1791 = vld [vmem:[%s7 + $0x9c8] sm:$0xff]
    %v1792 = vld [vmem:[%s7 + $0x9d0] sm:$0xff]
    %v1793 = vld [vmem:[%s7 + $0x9d8] sm:$0xff]
    %v1794 = vld [vmem:[%s7 + $0x9e0] sm:$0xff]
    %v1795 = vld [vmem:[%s7 + $0x9e8] sm:$0xff]
    %v1796 = vld [vmem:[%s7 + $0x9f0] sm:$0xff]
    %v1797 = vld [vmem:[%s7 + $0x9f8] sm:$0xff]
    %v1798 = vld [vmem:[%s7 + $0xa00] sm:$0xff]
    %v1799 = vld [vmem:[%s7 + $0xa08] sm:$0xff]
    %v1800 = vld [vmem:[%s7 + $0xa10] sm:$0xff]
    %v1801 = vld [vmem:[%s7 + $0xa18] sm:$0xff]
    %v1802 = vld [vmem:[%s7 + $0xa20] sm:$0xff]
    %v1803 = vld [vmem:[%s7 + $0xa28] sm:$0xff]
    %v1804 = vld [vmem:[%s7 + $0xa30] sm:$0xff]
    %v1805 = vld [vmem:[%s7 + $0xa38] sm:$0xff]
    %v1806 = vld [vmem:[%s7 + $0xa40] sm:$0xff]
    %v1807 = vld [vmem:[%s7 + $0xa48] sm:$0xff]
    %v1808 = vld [vmem:[%s7 + $0xa50] sm:$0xff]
    %v1809 = vld [vmem:[%s7 + $0xa58] sm:$0xff]
    %v1810 = vld [vmem:[%s7 + $0xa60] sm:$0xff]
    %v1811 = vld [vmem:[%s7 + $0xa68] sm:$0xff]
    %v1812 = vld [vmem:[%s7 + $0xa70] sm:$0xff]
    %v1813 = vld [vmem:[%s7 + $0xa78] sm:$0xff]
    %v1814 = vld [vmem:[%s7 + $0xa80] sm:$0xff]
    %v1815 = vld [vmem:[%s7 + $0xa88] sm:$0xff]
    %v1816 = vld [vmem:[%s7 + $0xa90] sm:$0xff]
    %v1817 = vld [vmem:[%s7 + $0xa98] sm:$0xff]
    %v1818 = vld [vmem:[%s7 + $0xaa0] sm:$0xff]
    %v1819 = vld [vmem:[%s7 + $0xaa8] sm:$0xff]
    %v1820 = vld [vmem:[%s7 + $0xab0] sm:$0xff]
    %v1821 = vld [vmem:[%s7 + $0xab8] sm:$0xff]
    %v1822 = vld [vmem:[%s7 + $0xac0] sm:$0xff]
    %v1823 = vld [vmem:[%s7 + $0xac8] sm:$0xff]
    %v1824 = vld [vmem:[%s7 + $0xad0] sm:$0xff]
    %v1825 = vld [vmem:[%s7 + $0xad8] sm:$0xff]
    %v1826 = vld [vmem:[%s7 + $0xae0] sm:$0xff]
    %v1827 = vld [vmem:[%s7 + $0xae8] sm:$0xff]
    %v1828 = vld [vmem:[%s7 + $0xaf0] sm:$0xff]
    %v1829 = vld [vmem:[%s7 + $0xaf8] sm:$0xff]
    %v1830 = vld [vmem:[%s7 + $0xb00] sm:$0xff]
    %v1831 = vld [vmem:[%s7 + $0xb08] sm:$0xff]
    %v1832 = vld [vmem:[%s7 + $0xb10] sm:$0xff]
    %v1833 = vld [vmem:[%s7 + $0xb18] sm:$0xff]
    %v1834 = vld [vmem:[%s7 + $0xb20] sm:$0xff]
    %v1835 = vld [vmem:[%s7 + $0xb28] sm:$0xff]
    %v1836 = vld [vmem:[%s7 + $0xb30] sm:$0xff]
    %v1837 = vld [vmem:[%s7 + $0xb38] sm:$0xff]
    %v1838 = vld [vmem:[%s7 + $0xb40] sm:$0xff]
    %v1839 = vld [vmem:[%s7 + $0xb48] sm:$0xff]
    %v1840 = vld [vmem:[%s7 + $0xb50] sm:$0xff]
    %v1841 = vld [vmem:[%s7 + $0xb58] sm:$0xff]
    %v1842 = vld [vmem:[%s7 + $0xb60] sm:$0xff]
    %v1843 = vld [vmem:[%s7 + $0xb68] sm:$0xff]
    %v1844 = vld [vmem:[%s7 + $0xb70] sm:$0xff]
    %v1845 = vld [vmem:[%s7 + $0xb78] sm:$0xff]
    %v1846 = vld [vmem:[%s7 + $0xb80] sm:$0xff]
    %v1847 = vld [vmem:[%s7 + $0xb88] sm:$0xff]
    %v1848 = vld [vmem:[%s7 + $0xb90] sm:$0xff]
    %v1849 = vld [vmem:[%s7 + $0xb98] sm:$0xff]
    %v1850 = vld [vmem:[%s7 + $0xba0] sm:$0xff]
    %v1851 = vld [vmem:[%s7 + $0xba8] sm:$0xff]
    %v1852 = vld [vmem:[%s7 + $0xbb0] sm:$0xff]
    %v1853 = vld [vmem:[%s7 + $0xbb8] sm:$0xff]
    %v1854 = vld [vmem:[%s7 + $0xbc0] sm:$0xff]
    %v1855 = vld [vmem:[%s7 + $0xbc8] sm:$0xff]
    %v1856 = vld [vmem:[%s7 + $0xbd0] sm:$0xff]
    %v1857 = vld [vmem:[%s7 + $0xbd8] sm:$0xff]
    %v1858 = vld [vmem:[%s7 + $0xbe0] sm:$0xff]
    %v1859 = vld [vmem:[%s7 + $0xbe8] sm:$0xff]
    %v1860 = vld [vmem:[%s7 + $0xbf0] sm:$0xff]
    %v1861 = vld [vmem:[%s7 + $0xbf8] sm:$0xff]
    %v1862 = vld [vmem:[%s7 + $0xc00] sm:$0xff]
    %v1863 = vld [vmem:[%s7 + $0xc08] sm:$0xff]
    %v1864 = vld [vmem:[%s7 + $0xc10] sm:$0xff]
    %v1865 = vld [vmem:[%s7 + $0xc18] sm:$0xff]
    %v1866 = vld [vmem:[%s7 + $0xc20] sm:$0xff]
    %v1867 = vld [vmem:[%s7 + $0xc28] sm:$0xff]
    %v1868 = vld [vmem:[%s7 + $0xc30] sm:$0xff]
    %v1869 = vld [vmem:[%s7 + $0xc38] sm:$0xff]
    %v1870 = vld [vmem:[%s7 + $0xc40] sm:$0xff]
    %v1871 = vld [vmem:[%s7 + $0xc48] sm:$0xff]
    %v1872 = vld [vmem:[%s7 + $0xc50] sm:$0xff]
    %v1873 = vld [vmem:[%s7 + $0xc58] sm:$0xff]
    %v1874 = vld [vmem:[%s7 + $0xc60] sm:$0xff]
    %v1875 = vld [vmem:[%s7 + $0xc68] sm:$0xff]
    %v1876 = vld [vmem:[%s7 + $0xc70] sm:$0xff]
    %v1877 = vld [vmem:[%s7 + $0xc78] sm:$0xff]
    %v1878 = vld [vmem:[%s7 + $0xc80] sm:$0xff]
    %v1879 = vld [vmem:[%s7 + $0xc88] sm:$0xff]
    %v1880 = vld [vmem:[%s7 + $0xc90] sm:$0xff]
    %v1881 = vld [vmem:[%s7 + $0xc98] sm:$0xff]
    %v1882 = vld [vmem:[%s7 + $0xca0] sm:$0xff]
    %v1883 = vld [vmem:[%s7 + $0xca8] sm:$0xff]
    %v1884 = vld [vmem:[%s7 + $0xcb0] sm:$0xff]
    %v1885 = vld [vmem:[%s7 + $0xcb8] sm:$0xff]
    %v1886 = vld [vmem:[%s7 + $0xcc0] sm:$0xff]
    %v1887 = vld [vmem:[%s7 + $0xcc8] sm:$0xff]
    %v1888 = vld [vmem:[%s7 + $0xcd0] sm:$0xff]
    %v1889 = vld [vmem:[%s7 + $0xcd8] sm:$0xff]
    %v1890 = vld [vmem:[%s7 + $0xce0] sm:$0xff]
    %v1891 = vld [vmem:[%s7 + $0xce8] sm:$0xff]
    %v1892 = vld [vmem:[%s7 + $0xcf0] sm:$0xff]
    %v1893 = vld [vmem:[%s7 + $0xcf8] sm:$0xff]
    %v1894 = vld [vmem:[%s7 + $0xd00] sm:$0xff]
    %v1895 = vld [vmem:[%s7 + $0xd08] sm:$0xff]
    %v1896 = vld [vmem:[%s7 + $0xd10] sm:$0xff]
    %v1897 = vld [vmem:[%s7 + $0xd18] sm:$0xff]
    %v1898 = vld [vmem:[%s7 + $0xd20] sm:$0xff]
    %v1899 = vld [vmem:[%s7 + $0xd28] sm:$0xff]
    %v1900 = vld [vmem:[%s7 + $0xd30] sm:$0xff]
    %v1901 = vld [vmem:[%s7 + $0xd38] sm:$0xff]
    %v1902 = vld [vmem:[%s7 + $0xd40] sm:$0xff]
    %v1903 = vld [vmem:[%s7 + $0xd48] sm:$0xff]
    %v1904 = vld [vmem:[%s7 + $0xd50] sm:$0xff]
    %v1905 = vld [vmem:[%s7 + $0xd58] sm:$0xff]
    %v1906 = vld [vmem:[%s7 + $0xd60] sm:$0xff]
    %v1907 = vld [vmem:[%s7 + $0xd68] sm:$0xff]
    %v1908 = vld [vmem:[%s7 + $0xd70] sm:$0xff]
    %v1909 = vld [vmem:[%s7 + $0xd78] sm:$0xff]
    %v1910 = vld [vmem:[%s7 + $0xd80] sm:$0xff]
    %v1911 = vld [vmem:[%s7 + $0xd88] sm:$0xff]
    %v1912 = vld [vmem:[%s7 + $0xd90] sm:$0xff]
    %v1913 = vld [vmem:[%s7 + $0xd98] sm:$0xff]
    %v1914 = vld [vmem:[%s7 + $0xda0] sm:$0xff]
    %v1915 = vld [vmem:[%s7 + $0xda8] sm:$0xff]
    %v1916 = vld [vmem:[%s7 + $0xdb0] sm:$0xff]
    %v1917 = vld [vmem:[%s7 + $0xdb8] sm:$0xff]
    %v1918 = vld [vmem:[%s7 + $0xdc0] sm:$0xff]
    %v1919 = vld [vmem:[%s7 + $0xdc8] sm:$0xff]
    %v1920 = vld [vmem:[%s7 + $0xdd0] sm:$0xff]
    %v1921 = vld [vmem:[%s7 + $0xdd8] sm:$0xff]
    %v1922 = vld [vmem:[%s7 + $0xde0] sm:$0xff]
    %v1923 = vld [vmem:[%s7 + $0xde8] sm:$0xff]
    %v1924 = vld [vmem:[%s7 + $0xdf0] sm:$0xff]
    %v1925 = vld [vmem:[%s7 + $0xdf8] sm:$0xff]
    %v1926 = vld [vmem:[%s8] sm:$0x7f]
    %v1928 = vlaneseq
    %v1929 = vshrl.u32 %v1928, 7
    %v1930 = vsub.s32 0, %v1929
    %v1931 = vrot.slane %v1926, %v1930
    %v1932 = vlaneseq
    %v1933 = vshrl.u32 %v1932, 7
    %v1934 = vsub.s32 1, %v1933
    %v1935 = vrot.slane %v1926, %v1934
    %v1936 = vlaneseq
    %v1937 = vshrl.u32 %v1936, 7
    %v1938 = vsub.s32 2, %v1937
    %v1939 = vrot.slane %v1926, %v1938
    %v1940 = vlaneseq
    %v1941 = vshrl.u32 %v1940, 7
    %v1942 = vsub.s32 3, %v1941
    %v1943 = vrot.slane %v1926, %v1942
    %v1944 = vlaneseq
    %v1945 = vshrl.u32 %v1944, 7
    %v1946 = vsub.s32 4, %v1945
    %v1947 = vrot.slane %v1926, %v1946
    %v1948 = vlaneseq
    %v1949 = vshrl.u32 %v1948, 7
    %v1950 = vsub.s32 5, %v1949
    %v1951 = vrot.slane %v1926, %v1950
    %v1952 = vlaneseq
    %v1953 = vshrl.u32 %v1952, 7
    %v1954 = vsub.s32 6, %v1953
    %v1955 = vrot.slane %v1926, %v1954
    %1963 = vmatprep.subr.mxu0 %v1584
    %1964 = vmatpush1.msra.mxu0 %v1583
    %1965 = vmatprep.subr.mxu0 %v1577
    %1966 = vmatpush1.msra.mxu0 %v1576
    %1967 = vmatprep.subr.mxu0 %v1570
    %1968 = vmatpush1.msra.mxu0 %v1569
    %1969 = vmatprep.subr.mxu0 %v1563
    %1970 = vmatpush1.msra.mxu0 %v1562
    %1971 = vmatprep.subr.mxu0 %v1556
    %1972 = vmatpush1.msra.mxu0 %v1555
    %1973 = vmatprep.subr.mxu0 %v1549
    %1974 = vmatpush1.msra.mxu0 %v1548
    %1975 = vmatprep.subr.mxu0 %v1542
    %1976 = vmatpush1.msra.mxu0 %v1541
    %1977 = vmatprep.subr.mxu0 %v1535
    %1978 = vmatpush1.msra.mxu0 %v1534
    %1979 = vmatprep.subr.mxu0 %v1528
    %1980 = vmatpush1.msra.mxu0 %v1527
    %1981 = vmatprep.subr.mxu0 %v1521
    %1982 = vmatpush1.msra.mxu0 %v1520
    %1983 = vmatprep.subr.mxu0 %v1514
    %1984 = vmatpush1.msra.mxu0 %v1513
    %1985 = vmatprep.subr.mxu0 %v1507
    %1986 = vmatpush1.msra.mxu0 %v1506
    %1987 = vmatprep.subr.mxu0 %v1500
    %1988 = vmatpush1.msra.mxu0 %v1499
    %1989 = vmatprep.subr.mxu0 %v1493
    %1990 = vmatpush1.msra.mxu0 %v1492
    %1991 = vmatprep.subr.mxu0 %v1486
    %1992 = vmatpush1.msra.mxu0 %v1485
    %1993 = vmatprep.subr.mxu0 %v1479
    %1994 = vmatpush1.msra.mxu0 %v1478
    %1995 = vmatprep.subr.mxu0 %v1696
    %1996 = vmatpush2.msra.mxu0 %v1695
    %1997 = vmatprep.subr.mxu0 %v1689
    %1998 = vmatpush2.msra.mxu0 %v1688
    %1999 = vmatprep.subr.mxu0 %v1682
    %2000 = vmatpush2.msra.mxu0 %v1681
    %2001 = vmatprep.subr.mxu0 %v1675
    %2002 = vmatpush2.msra.mxu0 %v1674
    %2003 = vmatprep.subr.mxu0 %v1668
    %2004 = vmatpush2.msra.mxu0 %v1667
    %2005 = vmatprep.subr.mxu0 %v1661
    %2006 = vmatpush2.msra.mxu0 %v1660
    %2007 = vmatprep.subr.mxu0 %v1654
    %2008 = vmatpush2.msra.mxu0 %v1653
    %2009 = vmatprep.subr.mxu0 %v1647
    %2010 = vmatpush2.msra.mxu0 %v1646
    %2011 = vmatprep.subr.mxu0 %v1640
    %2012 = vmatpush2.msra.mxu0 %v1639
    %2013 = vmatprep.subr.mxu0 %v1633
    %2014 = vmatpush2.msra.mxu0 %v1632
    %2015 = vmatprep.subr.mxu0 %v1626
    %2016 = vmatpush2.msra.mxu0 %v1625
    %2017 = vmatprep.subr.mxu0 %v1619
    %2018 = vmatpush2.msra.mxu0 %v1618
    %2019 = vmatprep.subr.mxu0 %v1612
    %2020 = vmatpush2.msra.mxu0 %v1611
    %2021 = vmatprep.subr.mxu0 %v1605
    %2022 = vmatpush2.msra.mxu0 %v1604
    %2023 = vmatprep.subr.mxu0 %v1598
    %2024 = vmatpush2.msra.mxu0 %v1597
    %2025 = vmatprep.subr.mxu0 %v1591
    %2026 = vmatpush2.msra.mxu0 %v1590
    %2027 = vmatprep.mubr.f32.mxu0 %v1475
    %2028 = vmatmul.mubr.f32.gmra.mxu0 %v1474
    %v2029 = vpop.f32.mrf.mxu0
    %v2030 = vadd.f32 %v1931, %v2029
    %v2031 = vpop.f32.mrf.mxu0
    %v2032 = vadd.f32 %v1935, %v2031
    %2033 = vdwg.mxu0
    %2034 = vmatprep.subr.mxu0 %v1808
    %2035 = vmatpush1.msra.mxu0 %v1807
    %2036 = vmatprep.subr.mxu0 %v1801
    %2037 = vmatpush1.msra.mxu0 %v1800
    %2038 = vmatprep.subr.mxu0 %v1794
    %2039 = vmatpush1.msra.mxu0 %v1793
    %2040 = vmatprep.subr.mxu0 %v1787
    %2041 = vmatpush1.msra.mxu0 %v1786
    %2042 = vmatprep.subr.mxu0 %v1780
    %2043 = vmatpush1.msra.mxu0 %v1779
    %2044 = vmatprep.subr.mxu0 %v1773
    %2045 = vmatpush1.msra.mxu0 %v1772
    %2046 = vmatprep.subr.mxu0 %v1766
    %2047 = vmatpush1.msra.mxu0 %v1765
    %2048 = vmatprep.subr.mxu0 %v1759
    %2049 = vmatpush1.msra.mxu0 %v1758
    %2050 = vmatprep.subr.mxu0 %v1752
    %2051 = vmatpush1.msra.mxu0 %v1751
    %2052 = vmatprep.subr.mxu0 %v1745
    %2053 = vmatpush1.msra.mxu0 %v1744
    %2054 = vmatprep.subr.mxu0 %v1738
    %2055 = vmatpush1.msra.mxu0 %v1737
    %2056 = vmatprep.subr.mxu0 %v1731
    %2057 = vmatpush1.msra.mxu0 %v1730
    %2058 = vmatprep.subr.mxu0 %v1724
    %2059 = vmatpush1.msra.mxu0 %v1723
    %2060 = vmatprep.subr.mxu0 %v1717
    %2061 = vmatpush1.msra.mxu0 %v1716
    %2062 = vmatprep.subr.mxu0 %v1710
    %2063 = vmatpush1.msra.mxu0 %v1709
    %2064 = vmatprep.subr.mxu0 %v1703
    %2065 = vmatpush1.msra.mxu0 %v1702
    %2066 = vmatprep.subr.mxu0 %v1920
    %2067 = vmatpush2.msra.mxu0 %v1919
    %2068 = vmatprep.subr.mxu0 %v1913
    %2069 = vmatpush2.msra.mxu0 %v1912
    %2070 = vmatprep.subr.mxu0 %v1906
    %2071 = vmatpush2.msra.mxu0 %v1905
    %2072 = vmatprep.subr.mxu0 %v1899
    %2073 = vmatpush2.msra.mxu0 %v1898
    %2074 = vmatprep.subr.mxu0 %v1892
    %2075 = vmatpush2.msra.mxu0 %v1891
    %2076 = vmatprep.subr.mxu0 %v1885
    %2077 = vmatpush2.msra.mxu0 %v1884
    %2078 = vmatprep.subr.mxu0 %v1878
    %2079 = vmatpush2.msra.mxu0 %v1877
    %2080 = vmatprep.subr.mxu0 %v1871
    %2081 = vmatpush2.msra.mxu0 %v1870
    %2082 = vmatprep.subr.mxu0 %v1864
    %2083 = vmatpush2.msra.mxu0 %v1863
    %2084 = vmatprep.subr.mxu0 %v1857
    %2085 = vmatpush2.msra.mxu0 %v1856
    %2086 = vmatprep.subr.mxu0 %v1850
    %2087 = vmatpush2.msra.mxu0 %v1849
    %2088 = vmatprep.subr.mxu0 %v1843
    %2089 = vmatpush2.msra.mxu0 %v1842
    %2090 = vmatprep.subr.mxu0 %v1836
    %2091 = vmatpush2.msra.mxu0 %v1835
    %2092 = vmatprep.subr.mxu0 %v1829
    %2093 = vmatpush2.msra.mxu0 %v1828
    %2094 = vmatprep.subr.mxu0 %v1822
    %2095 = vmatpush2.msra.mxu0 %v1821
    %2096 = vmatprep.subr.mxu0 %v1815
    %2097 = vmatpush2.msra.mxu0 %v1814
    %2098 = vmatprep.mubr.f32.mxu0 %v1477
    %2099 = vmatmul.mubr.f32.gmra.mxu0 %v1476
    %v2100 = vpop.f32.mrf.mxu0
    %v2101 = vadd.f32 %v2030, %v2100
    %v2102 = vpop.f32.mrf.mxu0
    %v2103 = vadd.f32 %v2032, %v2102
    %2104 = vdwg.mxu0
    %2105 = vmatprep.subr.mxu0 %v1586
    %2106 = vmatpush1.msra.mxu0 %v1585
    %2107 = vmatprep.subr.mxu0 %v1579
    %2108 = vmatpush1.msra.mxu0 %v1578
    %2109 = vmatprep.subr.mxu0 %v1572
    %2110 = vmatpush1.msra.mxu0 %v1571
    %2111 = vmatprep.subr.mxu0 %v1565
    %2112 = vmatpush1.msra.mxu0 %v1564
    %2113 = vmatprep.subr.mxu0 %v1558
    %2114 = vmatpush1.msra.mxu0 %v1557
    %2115 = vmatprep.subr.mxu0 %v1551
    %2116 = vmatpush1.msra.mxu0 %v1550
    %2117 = vmatprep.subr.mxu0 %v1544
    %2118 = vmatpush1.msra.mxu0 %v1543
    %2119 = vmatprep.subr.mxu0 %v1537
    %2120 = vmatpush1.msra.mxu0 %v1536
    %2121 = vmatprep.subr.mxu0 %v1530
    %2122 = vmatpush1.msra.mxu0 %v1529
    %2123 = vmatprep.subr.mxu0 %v1523
    %2124 = vmatpush1.msra.mxu0 %v1522
    %2125 = vmatprep.subr.mxu0 %v1516
    %2126 = vmatpush1.msra.mxu0 %v1515
    %2127 = vmatprep.subr.mxu0 %v1509
    %2128 = vmatpush1.msra.mxu0 %v1508
    %2129 = vmatprep.subr.mxu0 %v1502
    %2130 = vmatpush1.msra.mxu0 %v1501
    %2131 = vmatprep.subr.mxu0 %v1495
    %2132 = vmatpush1.msra.mxu0 %v1494
    %2133 = vmatprep.subr.mxu0 %v1488
    %2134 = vmatpush1.msra.mxu0 %v1487
    %2135 = vmatprep.subr.mxu0 %v1481
    %2136 = vmatpush1.msra.mxu0 %v1480
    %2137 = vmatprep.subr.mxu0 %v1698
    %2138 = vmatpush2.msra.mxu0 %v1697
    %2139 = vmatprep.subr.mxu0 %v1691
    %2140 = vmatpush2.msra.mxu0 %v1690
    %2141 = vmatprep.subr.mxu0 %v1684
    %2142 = vmatpush2.msra.mxu0 %v1683
    %2143 = vmatprep.subr.mxu0 %v1677
    %2144 = vmatpush2.msra.mxu0 %v1676
    %2145 = vmatprep.subr.mxu0 %v1670
    %2146 = vmatpush2.msra.mxu0 %v1669
    %2147 = vmatprep.subr.mxu0 %v1663
    %2148 = vmatpush2.msra.mxu0 %v1662
    %2149 = vmatprep.subr.mxu0 %v1656
    %2150 = vmatpush2.msra.mxu0 %v1655
    %2151 = vmatprep.subr.mxu0 %v1649
    %2152 = vmatpush2.msra.mxu0 %v1648
    %2153 = vmatprep.subr.mxu0 %v1642
    %2154 = vmatpush2.msra.mxu0 %v1641
    %2155 = vmatprep.subr.mxu0 %v1635
    %2156 = vmatpush2.msra.mxu0 %v1634
    %2157 = vmatprep.subr.mxu0 %v1628
    %2158 = vmatpush2.msra.mxu0 %v1627
    %2159 = vmatprep.subr.mxu0 %v1621
    %2160 = vmatpush2.msra.mxu0 %v1620
    %2161 = vmatprep.subr.mxu0 %v1614
    %2162 = vmatpush2.msra.mxu0 %v1613
    %2163 = vmatprep.subr.mxu0 %v1607
    %2164 = vmatpush2.msra.mxu0 %v1606
    %2165 = vmatprep.subr.mxu0 %v1600
    %2166 = vmatpush2.msra.mxu0 %v1599
    %2167 = vmatprep.subr.mxu0 %v1593
    %2168 = vmatpush2.msra.mxu0 %v1592
    %2169 = vmatprep.mubr.f32.mxu0 %v1475
    %2170 = vmatmul.mubr.f32.gmra.mxu0 %v1474
    %v2171 = vpop.f32.mrf.mxu0
    %v2172 = vadd.f32 %v1939, %v2171
    %v2173 = vpop.f32.mrf.mxu0
    %v2174 = vadd.f32 %v1943, %v2173
    %2175 = vdwg.mxu0
    %2176 = vmatprep.subr.mxu0 %v1810
    %2177 = vmatpush1.msra.mxu0 %v1809
    %2178 = vmatprep.subr.mxu0 %v1803
    %2179 = vmatpush1.msra.mxu0 %v1802
    %2180 = vmatprep.subr.mxu0 %v1796
    %2181 = vmatpush1.msra.mxu0 %v1795
    %2182 = vmatprep.subr.mxu0 %v1789
    %2183 = vmatpush1.msra.mxu0 %v1788
    %2184 = vmatprep.subr.mxu0 %v1782
    %2185 = vmatpush1.msra.mxu0 %v1781
    %2186 = vmatprep.subr.mxu0 %v1775
    %2187 = vmatpush1.msra.mxu0 %v1774
    %2188 = vmatprep.subr.mxu0 %v1768
    %2189 = vmatpush1.msra.mxu0 %v1767
    %2190 = vmatprep.subr.mxu0 %v1761
    %2191 = vmatpush1.msra.mxu0 %v1760
    %2192 = vmatprep.subr.mxu0 %v1754
    %2193 = vmatpush1.msra.mxu0 %v1753
    %2194 = vmatprep.subr.mxu0 %v1747
    %2195 = vmatpush1.msra.mxu0 %v1746
    %2196 = vmatprep.subr.mxu0 %v1740
    %2197 = vmatpush1.msra.mxu0 %v1739
    %2198 = vmatprep.subr.mxu0 %v1733
    %2199 = vmatpush1.msra.mxu0 %v1732
    %2200 = vmatprep.subr.mxu0 %v1726
    %2201 = vmatpush1.msra.mxu0 %v1725
    %2202 = vmatprep.subr.mxu0 %v1719
    %2203 = vmatpush1.msra.mxu0 %v1718
    %2204 = vmatprep.subr.mxu0 %v1712
    %2205 = vmatpush1.msra.mxu0 %v1711
    %2206 = vmatprep.subr.mxu0 %v1705
    %2207 = vmatpush1.msra.mxu0 %v1704
    %2208 = vmatprep.subr.mxu0 %v1922
    %2209 = vmatpush2.msra.mxu0 %v1921
    %2210 = vmatprep.subr.mxu0 %v1915
    %2211 = vmatpush2.msra.mxu0 %v1914
    %2212 = vmatprep.subr.mxu0 %v1908
    %2213 = vmatpush2.msra.mxu0 %v1907
    %2214 = vmatprep.subr.mxu0 %v1901
    %2215 = vmatpush2.msra.mxu0 %v1900
    %2216 = vmatprep.subr.mxu0 %v1894
    %2217 = vmatpush2.msra.mxu0 %v1893
    %2218 = vmatprep.subr.mxu0 %v1887
    %2219 = vmatpush2.msra.mxu0 %v1886
    %2220 = vmatprep.subr.mxu0 %v1880
    %2221 = vmatpush2.msra.mxu0 %v1879
    %2222 = vmatprep.subr.mxu0 %v1873
    %2223 = vmatpush2.msra.mxu0 %v1872
    %2224 = vmatprep.subr.mxu0 %v1866
    %2225 = vmatpush2.msra.mxu0 %v1865
    %2226 = vmatprep.subr.mxu0 %v1859
    %2227 = vmatpush2.msra.mxu0 %v1858
    %2228 = vmatprep.subr.mxu0 %v1852
    %2229 = vmatpush2.msra.mxu0 %v1851
    %2230 = vmatprep.subr.mxu0 %v1845
    %2231 = vmatpush2.msra.mxu0 %v1844
    %2232 = vmatprep.subr.mxu0 %v1838
    %2233 = vmatpush2.msra.mxu0 %v1837
    %2234 = vmatprep.subr.mxu0 %v1831
    %2235 = vmatpush2.msra.mxu0 %v1830
    %2236 = vmatprep.subr.mxu0 %v1824
    %2237 = vmatpush2.msra.mxu0 %v1823
    %2238 = vmatprep.subr.mxu0 %v1817
    %2239 = vmatpush2.msra.mxu0 %v1816
    %2240 = vmatprep.mubr.f32.mxu0 %v1477
    %2241 = vmatmul.mubr.f32.gmra.mxu0 %v1476
    %v2242 = vpop.f32.mrf.mxu0
    %v2243 = vadd.f32 %v2172, %v2242
    %v2244 = vpop.f32.mrf.mxu0
    %v2245 = vadd.f32 %v2174, %v2244
    %2246 = vdwg.mxu0
    %2247 = vmatprep.subr.mxu0 %v1588
    %2248 = vmatpush1.msra.mxu0 %v1587
    %2249 = vmatprep.subr.mxu0 %v1581
    %2250 = vmatpush1.msra.mxu0 %v1580
    %2251 = vmatprep.subr.mxu0 %v1574
    %2252 = vmatpush1.msra.mxu0 %v1573
    %2253 = vmatprep.subr.mxu0 %v1567
    %2254 = vmatpush1.msra.mxu0 %v1566
    %2255 = vmatprep.subr.mxu0 %v1560
    %2256 = vmatpush1.msra.mxu0 %v1559
    %2257 = vmatprep.subr.mxu0 %v1553
    %2258 = vmatpush1.msra.mxu0 %v1552
    %2259 = vmatprep.subr.mxu0 %v1546
    %2260 = vmatpush1.msra.mxu0 %v1545
    %2261 = vmatprep.subr.mxu0 %v1539
    %2262 = vmatpush1.msra.mxu0 %v1538
    %2263 = vmatprep.subr.mxu0 %v1532
    %2264 = vmatpush1.msra.mxu0 %v1531
    %2265 = vmatprep.subr.mxu0 %v1525
    %2266 = vmatpush1.msra.mxu0 %v1524
    %2267 = vmatprep.subr.mxu0 %v1518
    %2268 = vmatpush1.msra.mxu0 %v1517
    %2269 = vmatprep.subr.mxu0 %v1511
    %2270 = vmatpush1.msra.mxu0 %v1510
    %2271 = vmatprep.subr.mxu0 %v1504
    %2272 = vmatpush1.msra.mxu0 %v1503
    %2273 = vmatprep.subr.mxu0 %v1497
    %2274 = vmatpush1.msra.mxu0 %v1496
    %2275 = vmatprep.subr.mxu0 %v1490
    %2276 = vmatpush1.msra.mxu0 %v1489
    %2277 = vmatprep.subr.mxu0 %v1483
    %2278 = vmatpush1.msra.mxu0 %v1482
    %2279 = vmatprep.subr.mxu0 %v1700
    %2280 = vmatpush2.msra.mxu0 %v1699
    %2281 = vmatprep.subr.mxu0 %v1693
    %2282 = vmatpush2.msra.mxu0 %v1692
    %2283 = vmatprep.subr.mxu0 %v1686
    %2284 = vmatpush2.msra.mxu0 %v1685
    %2285 = vmatprep.subr.mxu0 %v1679
    %2286 = vmatpush2.msra.mxu0 %v1678
    %2287 = vmatprep.subr.mxu0 %v1672
    %2288 = vmatpush2.msra.mxu0 %v1671
    %2289 = vmatprep.subr.mxu0 %v1665
    %2290 = vmatpush2.msra.mxu0 %v1664
    %2291 = vmatprep.subr.mxu0 %v1658
    %2292 = vmatpush2.msra.mxu0 %v1657
    %2293 = vmatprep.subr.mxu0 %v1651
    %2294 = vmatpush2.msra.mxu0 %v1650
    %2295 = vmatprep.subr.mxu0 %v1644
    %2296 = vmatpush2.msra.mxu0 %v1643
    %2297 = vmatprep.subr.mxu0 %v1637
    %2298 = vmatpush2.msra.mxu0 %v1636
    %2299 = vmatprep.subr.mxu0 %v1630
    %2300 = vmatpush2.msra.mxu0 %v1629
    %2301 = vmatprep.subr.mxu0 %v1623
    %2302 = vmatpush2.msra.mxu0 %v1622
    %2303 = vmatprep.subr.mxu0 %v1616
    %2304 = vmatpush2.msra.mxu0 %v1615
    %2305 = vmatprep.subr.mxu0 %v1609
    %2306 = vmatpush2.msra.mxu0 %v1608
    %2307 = vmatprep.subr.mxu0 %v1602
    %2308 = vmatpush2.msra.mxu0 %v1601
    %2309 = vmatprep.subr.mxu0 %v1595
    %2310 = vmatpush2.msra.mxu0 %v1594
    %2311 = vmatprep.mubr.f32.mxu0 %v1475
    %2312 = vmatmul.mubr.f32.gmra.mxu0 %v1474
    %v2313 = vpop.f32.mrf.mxu0
    %v2314 = vadd.f32 %v1947, %v2313
    %v2315 = vpop.f32.mrf.mxu0
    %v2316 = vadd.f32 %v1951, %v2315
    %2317 = vdwg.mxu0
    %2318 = vmatprep.subr.mxu0 %v1812
    %2319 = vmatpush1.msra.mxu0 %v1811
    %2320 = vmatprep.subr.mxu0 %v1805
    %2321 = vmatpush1.msra.mxu0 %v1804
    %2322 = vmatprep.subr.mxu0 %v1798
    %2323 = vmatpush1.msra.mxu0 %v1797
    %2324 = vmatprep.subr.mxu0 %v1791
    %2325 = vmatpush1.msra.mxu0 %v1790
    %2326 = vmatprep.subr.mxu0 %v1784
    %2327 = vmatpush1.msra.mxu0 %v1783
    %2328 = vmatprep.subr.mxu0 %v1777
    %2329 = vmatpush1.msra.mxu0 %v1776
    %2330 = vmatprep.subr.mxu0 %v1770
    %2331 = vmatpush1.msra.mxu0 %v1769
    %2332 = vmatprep.subr.mxu0 %v1763
    %2333 = vmatpush1.msra.mxu0 %v1762
    %2334 = vmatprep.subr.mxu0 %v1756
    %2335 = vmatpush1.msra.mxu0 %v1755
    %2336 = vmatprep.subr.mxu0 %v1749
    %2337 = vmatpush1.msra.mxu0 %v1748
    %2338 = vmatprep.subr.mxu0 %v1742
    %2339 = vmatpush1.msra.mxu0 %v1741
    %2340 = vmatprep.subr.mxu0 %v1735
    %2341 = vmatpush1.msra.mxu0 %v1734
    %2342 = vmatprep.subr.mxu0 %v1728
    %2343 = vmatpush1.msra.mxu0 %v1727
    %2344 = vmatprep.subr.mxu0 %v1721
    %2345 = vmatpush1.msra.mxu0 %v1720
    %2346 = vmatprep.subr.mxu0 %v1714
    %2347 = vmatpush1.msra.mxu0 %v1713
    %2348 = vmatprep.subr.mxu0 %v1707
    %2349 = vmatpush1.msra.mxu0 %v1706
    %2350 = vmatprep.subr.mxu0 %v1924
    %2351 = vmatpush2.msra.mxu0 %v1923
    %2352 = vmatprep.subr.mxu0 %v1917
    %2353 = vmatpush2.msra.mxu0 %v1916
    %2354 = vmatprep.subr.mxu0 %v1910
    %2355 = vmatpush2.msra.mxu0 %v1909
    %2356 = vmatprep.subr.mxu0 %v1903
    %2357 = vmatpush2.msra.mxu0 %v1902
    %2358 = vmatprep.subr.mxu0 %v1896
    %2359 = vmatpush2.msra.mxu0 %v1895
    %2360 = vmatprep.subr.mxu0 %v1889
    %2361 = vmatpush2.msra.mxu0 %v1888
    %2362 = vmatprep.subr.mxu0 %v1882
    %2363 = vmatpush2.msra.mxu0 %v1881
    %2364 = vmatprep.subr.mxu0 %v1875
    %2365 = vmatpush2.msra.mxu0 %v1874
    %2366 = vmatprep.subr.mxu0 %v1868
    %2367 = vmatpush2.msra.mxu0 %v1867
    %2368 = vmatprep.subr.mxu0 %v1861
    %2369 = vmatpush2.msra.mxu0 %v1860
    %2370 = vmatprep.subr.mxu0 %v1854
    %2371 = vmatpush2.msra.mxu0 %v1853
    %2372 = vmatprep.subr.mxu0 %v1847
    %2373 = vmatpush2.msra.mxu0 %v1846
    %2374 = vmatprep.subr.mxu0 %v1840
    %2375 = vmatpush2.msra.mxu0 %v1839
    %2376 = vmatprep.subr.mxu0 %v1833
    %2377 = vmatpush2.msra.mxu0 %v1832
    %2378 = vmatprep.subr.mxu0 %v1826
    %2379 = vmatpush2.msra.mxu0 %v1825
    %2380 = vmatprep.subr.mxu0 %v1819
    %2381 = vmatpush2.msra.mxu0 %v1818
    %2382 = vmatprep.mubr.f32.mxu0 %v1477
    %2383 = vmatmul.mubr.f32.gmra.mxu0 %v1476
    %v2384 = vpop.f32.mrf.mxu0
    %v2385 = vadd.f32 %v2314, %v2384
    %v2386 = vpop.f32.mrf.mxu0
    %v2387 = vadd.f32 %v2316, %v2386
    %2388 = vdwg.mxu0
    %2389 = vmatprep.subr.mxu0 0.0
    %2390 = vmatpush1.msra.mxu0 %v1589
    %2391 = vmatprep.subr.mxu0 0.0
    %2392 = vmatpush1.msra.mxu0 %v1582
    %2393 = vmatprep.subr.mxu0 0.0
    %2394 = vmatpush1.msra.mxu0 %v1575
    %2395 = vmatprep.subr.mxu0 0.0
    %2396 = vmatpush1.msra.mxu0 %v1568
    %2397 = vmatprep.subr.mxu0 0.0
    %2398 = vmatpush1.msra.mxu0 %v1561
    %2399 = vmatprep.subr.mxu0 0.0
    %2400 = vmatpush1.msra.mxu0 %v1554
    %2401 = vmatprep.subr.mxu0 0.0
    %2402 = vmatpush1.msra.mxu0 %v1547
    %2403 = vmatprep.subr.mxu0 0.0
    %2404 = vmatpush1.msra.mxu0 %v1540
    %2405 = vmatprep.subr.mxu0 0.0
    %2406 = vmatpush1.msra.mxu0 %v1533
    %2407 = vmatprep.subr.mxu0 0.0
    %2408 = vmatpush1.msra.mxu0 %v1526
    %2409 = vmatprep.subr.mxu0 0.0
    %2410 = vmatpush1.msra.mxu0 %v1519
    %2411 = vmatprep.subr.mxu0 0.0
    %2412 = vmatpush1.msra.mxu0 %v1512
    %2413 = vmatprep.subr.mxu0 0.0
    %2414 = vmatpush1.msra.mxu0 %v1505
    %2415 = vmatprep.subr.mxu0 0.0
    %2416 = vmatpush1.msra.mxu0 %v1498
    %2417 = vmatprep.subr.mxu0 0.0
    %2418 = vmatpush1.msra.mxu0 %v1491
    %2419 = vmatprep.subr.mxu0 0.0
    %2420 = vmatpush1.msra.mxu0 %v1484
    %2421 = vmatprep.subr.mxu0 0.0
    %2422 = vmatpush2.msra.mxu0 %v1701
    %2423 = vmatprep.subr.mxu0 0.0
    %2424 = vmatpush2.msra.mxu0 %v1694
    %2425 = vmatprep.subr.mxu0 0.0
    %2426 = vmatpush2.msra.mxu0 %v1687
    %2427 = vmatprep.subr.mxu0 0.0
    %2428 = vmatpush2.msra.mxu0 %v1680
    %2429 = vmatprep.subr.mxu0 0.0
    %2430 = vmatpush2.msra.mxu0 %v1673
    %2431 = vmatprep.subr.mxu0 0.0
    %2432 = vmatpush2.msra.mxu0 %v1666
    %2433 = vmatprep.subr.mxu0 0.0
    %2434 = vmatpush2.msra.mxu0 %v1659
    %2435 = vmatprep.subr.mxu0 0.0
    %2436 = vmatpush2.msra.mxu0 %v1652
    %2437 = vmatprep.subr.mxu0 0.0
    %2438 = vmatpush2.msra.mxu0 %v1645
    %2439 = vmatprep.subr.mxu0 0.0
    %2440 = vmatpush2.msra.mxu0 %v1638
    %2441 = vmatprep.subr.mxu0 0.0
    %2442 = vmatpush2.msra.mxu0 %v1631
    %2443 = vmatprep.subr.mxu0 0.0
    %2444 = vmatpush2.msra.mxu0 %v1624
    %2445 = vmatprep.subr.mxu0 0.0
    %2446 = vmatpush2.msra.mxu0 %v1617
    %2447 = vmatprep.subr.mxu0 0.0
    %2448 = vmatpush2.msra.mxu0 %v1610
    %2449 = vmatprep.subr.mxu0 0.0
    %2450 = vmatpush2.msra.mxu0 %v1603
    %2451 = vmatprep.subr.mxu0 0.0
    %2452 = vmatpush2.msra.mxu0 %v1596
    %2453 = vmatprep.mubr.f32.mxu0 %v1475
    %2454 = vmatmul.mubr.f32.gmra.mxu0 %v1474
    %v2455 = vpop.f32.mrf.mxu0
    %v2456 = vadd.f32 %v1955, %v2455
    %v2457 = vpop.f32.mrf.mxu0
    %2458 = vdwg.mxu0
    %2459 = vmatprep.subr.mxu0 0.0
    %2460 = vmatpush1.msra.mxu0 %v1813
    %2461 = vmatprep.subr.mxu0 0.0
    %2462 = vmatpush1.msra.mxu0 %v1806
    %2463 = vmatprep.subr.mxu0 0.0
    %2464 = vmatpush1.msra.mxu0 %v1799
    %2465 = vmatprep.subr.mxu0 0.0
    %2466 = vmatpush1.msra.mxu0 %v1792
    %2467 = vmatprep.subr.mxu0 0.0
    %2468 = vmatpush1.msra.mxu0 %v1785
    %2469 = vmatprep.subr.mxu0 0.0
    %2470 = vmatpush1.msra.mxu0 %v1778
    %2471 = vmatprep.subr.mxu0 0.0
    %2472 = vmatpush1.msra.mxu0 %v1771
    %2473 = vmatprep.subr.mxu0 0.0
    %2474 = vmatpush1.msra.mxu0 %v1764
    %2475 = vmatprep.subr.mxu0 0.0
    %2476 = vmatpush1.msra.mxu0 %v1757
    %2477 = vmatprep.subr.mxu0 0.0
    %2478 = vmatpush1.msra.mxu0 %v1750
    %2479 = vmatprep.subr.mxu0 0.0
    %2480 = vmatpush1.msra.mxu0 %v1743
    %2481 = vmatprep.subr.mxu0 0.0
    %2482 = vmatpush1.msra.mxu0 %v1736
    %2483 = vmatprep.subr.mxu0 0.0
    %2484 = vmatpush1.msra.mxu0 %v1729
    %2485 = vmatprep.subr.mxu0 0.0
    %2486 = vmatpush1.msra.mxu0 %v1722
    %2487 = vmatprep.subr.mxu0 0.0
    %2488 = vmatpush1.msra.mxu0 %v1715
    %2489 = vmatprep.subr.mxu0 0.0
    %2490 = vmatpush1.msra.mxu0 %v1708
    %2491 = vmatprep.subr.mxu0 0.0
    %2492 = vmatpush2.msra.mxu0 %v1925
    %2493 = vmatprep.subr.mxu0 0.0
    %2494 = vmatpush2.msra.mxu0 %v1918
    %2495 = vmatprep.subr.mxu0 0.0
    %2496 = vmatpush2.msra.mxu0 %v1911
    %2497 = vmatprep.subr.mxu0 0.0
    %2498 = vmatpush2.msra.mxu0 %v1904
    %2499 = vmatprep.subr.mxu0 0.0
    %2500 = vmatpush2.msra.mxu0 %v1897
    %2501 = vmatprep.subr.mxu0 0.0
    %2502 = vmatpush2.msra.mxu0 %v1890
    %2503 = vmatprep.subr.mxu0 0.0
    %2504 = vmatpush2.msra.mxu0 %v1883
    %2505 = vmatprep.subr.mxu0 0.0
    %2506 = vmatpush2.msra.mxu0 %v1876
    %2507 = vmatprep.subr.mxu0 0.0
    %2508 = vmatpush2.msra.mxu0 %v1869
    %2509 = vmatprep.subr.mxu0 0.0
    %2510 = vmatpush2.msra.mxu0 %v1862
    %2511 = vmatprep.subr.mxu0 0.0
    %2512 = vmatpush2.msra.mxu0 %v1855
    %2513 = vmatprep.subr.mxu0 0.0
    %2514 = vmatpush2.msra.mxu0 %v1848
    %2515 = vmatprep.subr.mxu0 0.0
    %2516 = vmatpush2.msra.mxu0 %v1841
    %2517 = vmatprep.subr.mxu0 0.0
    %2518 = vmatpush2.msra.mxu0 %v1834
    %2519 = vmatprep.subr.mxu0 0.0
    %2520 = vmatpush2.msra.mxu0 %v1827
    %2521 = vmatprep.subr.mxu0 0.0
    %2522 = vmatpush2.msra.mxu0 %v1820
    %2523 = vmatprep.mubr.f32.mxu0 %v1477
    %2524 = vmatmul.mubr.f32.gmra.mxu0 %v1476
    %v2525 = vpop.f32.mrf.mxu0
    %v2526 = vadd.f32 %v2456, %v2525
    %v2527 = vpop.f32.mrf.mxu0
    %2528 = vdwg.mxu0
    %v2529 = vxor.u32 %v2101, 2147483648
    %v2530 = vxor.u32 %v2103, 2147483648
    %v2531 = vxor.u32 %v2243, 2147483648
    %v2532 = vxor.u32 %v2245, 2147483648
    %v2533 = vxor.u32 %v2385, 2147483648
    %v2534 = vxor.u32 %v2387, 2147483648
    %v2535 = vxor.u32 %v2526, 2147483648
    %v2536 = vmul.f32 %v2529, 1.442695
    %v2537 = vpow.pop %v2536
    %v2538 = vmul.f32 %v2530, 1.442695
    %v2539 = vpow.pop %v2538
    %v2540 = vmul.f32 %v2531, 1.442695
    %v2541 = vpow.pop %v2540
    %v2542 = vmul.f32 %v2532, 1.442695
    %v2543 = vpow.pop %v2542
    %v2544 = vmul.f32 %v2533, 1.442695
    %v2545 = vpow.pop %v2544
    %v2546 = vmul.f32 %v2534, 1.442695
    %v2547 = vpow.pop %v2546
    %v2548 = vmul.f32 %v2535, 1.442695
    %v2549 = vpow.pop %v2548
    %v2550 = vadd.f32 %v2537, 1.0
    %v2551 = vadd.f32 %v2539, 1.0
    %v2552 = vadd.f32 %v2541, 1.0
    %v2553 = vadd.f32 %v2543, 1.0
    %v2554 = vadd.f32 %v2545, 1.0
    %v2555 = vadd.f32 %v2547, 1.0
    %v2556 = vadd.f32 %v2549, 1.0
    %v2557 = vrcp.pop %v2550
    %v2558 = vmul.f32 1.0, %v2557
    %v2559 = vrcp.pop %v2551
    %v2560 = vmul.f32 1.0, %v2559
    %v2561 = vrcp.pop %v2552
    %v2562 = vmul.f32 1.0, %v2561
    %v2563 = vrcp.pop %v2553
    %v2564 = vmul.f32 1.0, %v2563
    %v2565 = vrcp.pop %v2554
    %v2566 = vmul.f32 1.0, %v2565
    %v2567 = vrcp.pop %v2555
    %v2568 = vmul.f32 1.0, %v2567
    %v2569 = vrcp.pop %v2556
    %v2570 = vmul.f32 1.0, %v2569
    %2571 = vst [vmem:[#allocation2] sm:$0xff] %v2558
    %2572 = vst [vmem:[#allocation2 + $0x8] sm:$0xff] %v2560
    %2573 = vst [vmem:[#allocation2 + $0x10] sm:$0xff] %v2562
    %2574 = vst [vmem:[#allocation2 + $0x18] sm:$0xff] %v2564
    %2575 = vst [vmem:[#allocation2 + $0x20] sm:$0xff] %v2566
    %2576 = vst [vmem:[#allocation2 + $0x28] sm:$0xff] %v2568
    %2577 = vst.msk [vmem:[#allocation2 + $0x30] sm:$0xff] %vm457, %v2570
    // Predicated region
    $region38: #{autoencoder_forward.1} parent=1 // pred_check
      _
    $region39: #{autoencoder_forward.1} parent=1 // pred_check_branch
      %2579 = sbr.rel (0) target = $region41
    $region40: #{autoencoder_forward.1} parent=1 // pred_region
      %s2581 = ssub.s32 896, 896
      %2582 = vsyncadd [#allocation3], %s2581
      %s2584 = sshll.u32 [#allocation2], 4
      %s2585 = int_to_ptr.vmem [resolvable:$true] %s2584
      %2587 = dma.vmem_to_hbm [thread:$0]  %s2585, 896, %s9, [#allocation3]
    $region41: #{autoencoder_forward.1} parent=1 // pred_fallthru
      _
    // Predicated region
    $region42: #{autoencoder_forward.1} parent=1 // pred_check
      _
    $region43: #{autoencoder_forward.1} parent=1 // pred_check_branch
      %2589 = sbr.rel (0) target = $region45
    $region44: #{autoencoder_forward.1} parent=1 // pred_region
      %s2591 = ssub.s32 128, 128
      %2592 = vsyncadd [#allocation5], %s2591
      %s2594 = sshll.u32 [#allocation4], 4
      %s2595 = int_to_ptr.vmem [resolvable:$true] %s2594
      %2597 = dma.vmem_to_hbm [thread:$0]  %s2595, 128, %s10, [#allocation5]
    $region45: #{autoencoder_forward.1} parent=1 // pred_fallthru
      _
    // Predicated region
    $region46: #{autoencoder_forward.1} parent=1 // pred_check
      _
    $region47: #{autoencoder_forward.1} parent=1 // pred_check_branch
      %2599 = sbr.rel (0) target = $region49
    $region48: #{autoencoder_forward.1} parent=1 // pred_region
      %2600 = dma.done [#allocation3], 896
    $region49: #{autoencoder_forward.1} parent=1 // pred_fallthru
      _
    // Predicated region
    $region50: #{autoencoder_forward.1} parent=1 // pred_check
      _
    $region51: #{autoencoder_forward.1} parent=1 // pred_check_branch
      %2602 = sbr.rel (0) target = $region53
    $region52: #{autoencoder_forward.1} parent=1 // pred_region
      %2603 = dma.done [#allocation5], 128
    $region53: #{autoencoder_forward.1} parent=1 // pred_fallthru
      _
    %2604 = vsyncpa [#allocation3], 1
    %2605 = vsyncpa [#allocation5], 1

</llo_original>
